<compile_context>
chip_gen: v7x
topology: tpu7x:2x2x1
jax: 0.10.0
libtpu: 0.0.40
codegen_flags: <defaults>
</compile_context>

<pallas_src>
import math
import functools

import jax
import jax.numpy as jnp
from jax.experimental import pallas as pl
from jax.experimental.pallas import tpu as pltpu

# --- model hyper-parameters (small, consistent with the module's __init__) ---
IN_CHANNELS = 4
MODEL_CHANNELS = 32
BOTTLENECK_CHANNELS = 64
TIME_EMBED_DIM = 32
OUT_CHANNELS = 4
NUM_RES_BLOCKS = 2
FREQ_EMBED = 256          # TimestepEmbedder.frequency_embedding_size
# use_context=False (default) -> no context branch.


def _silu(x):
    return x * jax.nn.sigmoid(x)


def _layernorm(x, g, b, eps):
    # single-pass LN: var = E[x^2] - mu^2 (one fewer full-tile subtract+square on VPU)
    mu = jnp.mean(x, axis=-1, keepdims=True)
    ms = jnp.mean(x * x, axis=-1, keepdims=True)
    var = ms - mu * mu
    return (x - mu) * jax.lax.rsqrt(var + eps) * g + b


def simple_mlp_kernel(num_res_blocks,
                      # activations (bf16, pre-cast in wrapper)
                      x_ref, ea_ref,
                      # input_proj
                      wp_ref, bp_ref,
                      # stacked ResBlock params (leading axis = block index)
                      ln1g_ref, ln1b_ref, win_ref, wemb_ref, bsum_ref,
                      ln2g_ref, ln2b_ref, wout_ref, bout_ref,
                      # final head
                      lnfg_ref, lnfb_ref, wf_ref, bf_ref,
                      # output
                      o_ref):
    f32, bf16 = jnp.float32, jnp.bfloat16

    # SiLU(time_embed(t)) precomputed in the wrapper; shared by every ResBlock.
    emb_act = ea_ref[...]                                  # bf16 already

    # input_proj: Linear(in_channels, model_channels). bf16 MXU operands, f32 accum.
    h = (jnp.dot(x_ref[...], wp_ref[...], preferred_element_type=f32) + bp_ref[...])

    # ResBlocks (sequentially dependent -> unrolled)
    for i in range(num_res_blocks):
        a = _silu(_layernorm(h, ln1g_ref[i], ln1b_ref[i], 1e-5)).astype(bf16)
        # in_layers Linear + emb_layers Linear. The emb contribution is kept as its
        # own tiny MXU matmul (MXU is ~6% utilized, so it's free) rather than a
        # lane-axis concat, which cost XLU relayout work on the binding path.
        # Biases are pre-summed in the wrapper (bsum = b_in + b_emb).
        hh = (jnp.dot(a, win_ref[i], preferred_element_type=f32)
              + jnp.dot(emb_act, wemb_ref[i], preferred_element_type=f32)
              + bsum_ref[i])
        hh = _silu(_layernorm(hh, ln2g_ref[i], ln2b_ref[i], 1e-5)).astype(bf16)
        # nn.Dropout(p=dropout) is identity in eval mode.
        h = h + (jnp.dot(hh, wout_ref[i], preferred_element_type=f32) + bout_ref[i])

    # out head: LayerNorm(eps=1e-6) -> SiLU -> Linear
    o = _silu(_layernorm(h, lnfg_ref[...], lnfb_ref[...], 1e-6)).astype(bf16)
    o_ref[...] = (jnp.dot(o, wf_ref[...], preferred_element_type=f32)
                  + bf_ref[...]).astype(o_ref.dtype)


def timestep_embedding(t, dim, max_period=10000.0):
    """Same math as TimestepEmbedder.timestep_embedding (dim is even here)."""
    half = dim // 2
    freqs = jnp.exp(-math.log(max_period) * jnp.arange(half, dtype=jnp.float32) / half)
    args = t.astype(jnp.float32)[:, None] * freqs[None]
    return jnp.concatenate([jnp.cos(args), jnp.sin(args)], axis=-1)


def init_params(key):
    """Deterministic synthetic init (shapes follow the module's __init__).

    Note: layers wrapped by zero_module() would be zero-initialized in torch;
    we use small random values instead so the kernel output is non-trivial.
    """
    Cin, Cm, Mid, E, B = (IN_CHANNELS, MODEL_CHANNELS, BOTTLENECK_CHANNELS,
                          TIME_EMBED_DIM, NUM_RES_BLOCKS)
    keys = list(jax.random.split(key, 16))
    kit = iter(keys)

    def w(shape):
        return 0.05 * jax.random.normal(next(kit), shape, jnp.float32)

    params = [
        # input_proj
        w((Cin, Cm)), w((1, Cm)),
        # time_embed.mlp
        w((FREQ_EMBED, E)), w((1, E)), w((E, E)), w((1, E)),
        # ResBlocks, stacked along a leading block axis
        jnp.ones((B, 1, Cm), jnp.float32), jnp.zeros((B, 1, Cm), jnp.float32),   # in LN gamma/beta
        w((B, Cm, Mid)), w((B, 1, Mid)),                                         # in Linear
        w((B, E, Mid)), w((B, 1, Mid)),                                          # emb Linear
        jnp.ones((B, 1, Mid), jnp.float32), jnp.zeros((B, 1, Mid), jnp.float32), # out LN gamma/beta
        w((B, Mid, Cm)), w((B, 1, Cm)),                                          # out Linear (zero_module'd in torch)
        # final head
        jnp.ones((1, Cm), jnp.float32), jnp.zeros((1, Cm), jnp.float32),
        w((Cm, OUT_CHANNELS)), w((1, OUT_CHANNELS)),                             # zero_module'd in torch
    ]
    return params


def _round_up(x, m):
    return ((x + m - 1) // m) * m


def _num_tensorcores_per_chip():
    """Best-effort TC-per-chip count from the device kind string.

    v7x has 2 TensorCores per chip; v4/v5p are megacore pairs (Pallas 'parallel'
    dimension_semantics shards over them too). v5e/v6e are single-TC. On any
    failure default to 2 (safe everywhere, only costs one extra grid step)."""
    try:
        kind = (jax.devices()[0].device_kind or "").lower()
    except Exception:
        return 2
    if "v7" in kind or "v4" in kind or "v5p" in kind:
        return 2
    return 1


def _pick_tile(n, num_cores):
    """Batch tile policy.

    * multiple of 16 (bf16 activation blocks -> sublane packing constraint)
    * cap 8192 rows: per-row VMEM (double-buffered I/O + f32/bf16 temporaries) is
      ~1 KB, so 8192 rows stays comfortably under the 32 MiB scoped VMEM budget
      on every generation (v7x physical VMEM is 64 MiB).
    * single-TC chips (v5e/v6e): one maximal tile — splitting only doubles the
      ~0.35 us/step overhead with zero parallelism gain.
    * dual-core chips (v7x megas): even >= 2 step count so both cores get
      balanced work under dimension_semantics=("parallel",).
    """
    cap = 8192
    n = max(int(n), 16)
    if num_cores > 1 and n > 16:
        steps = 2 * pl.cdiv(n, 2 * cap)       # even step count, each tile <= cap
    else:
        steps = pl.cdiv(n, cap)               # fewest steps possible
    return min(cap, _round_up(pl.cdiv(n, steps), 16))


def simple_mlp_pallas(x4d, t, params, *, tile=None):
    (wp, bp, wt1, bt1, wt2, bt2,
     ln1g, ln1b, win, bin_, wemb, bemb, ln2g, ln2b, wout, bout,
     lnfg, lnfb, wf, bf) = params

    N = x4d.shape[0]
    x = x4d.reshape(N, IN_CHANNELS)            # robust to N == 1 (unlike .squeeze())

    # --- timestep branch as tiny plain-JAX glue (N x 256 x 32) -----------------
    # Streaming the [N, 256] sinusoid table into the kernel dominated HBM traffic;
    # hoist TimestepEmbedder + the leading SiLU of ResBlock.emb_layers here and feed
    # only the [N, E] activation to the kernel (same math, ~8x less per-row traffic).
    t_freq = timestep_embedding(t, FREQ_EMBED)
    te = _silu(t_freq @ wt1 + bt1) @ wt2 + bt2
    emb_act = _silu(te)                         # shared by every ResBlock

    # --- wrapper-side bf16 pre-cast of all MXU operands ------------------------
    # Halves the streamed bytes for x/emb_act and removes per-grid-step casts on
    # the resident weights. Biases and LN params stay f32 (f32 adds / LN math).
    bf16 = jnp.bfloat16
    x_b = x.astype(bf16)
    emb_b = emb_act.astype(bf16)
    wp_b = wp.astype(bf16)
    win_b = win.astype(bf16)
    wemb_b = wemb.astype(bf16)
    wout_b = wout.astype(bf16)
    wf_b = wf.astype(bf16)
    bsum = bin_ + bemb                          # fused in_layers + emb_layers bias

    if tile is None:
        tile = _pick_tile(N, _num_tensorcores_per_chip())
    n_pad = _round_up(N, tile)
    if n_pad != N:                              # pad batch; slice output at the end
        x_b = jnp.pad(x_b, ((0, n_pad - N), (0, 0)))
        emb_b = jnp.pad(emb_b, ((0, n_pad - N), (0, 0)))
    grid = (n_pad // tile,)

    kparams = [wp_b, bp, ln1g, ln1b, win_b, wemb_b, bsum, ln2g, ln2b, wout_b, bout,
               lnfg, lnfb, wf_b, bf]

    in_specs = [
        pl.BlockSpec((tile, IN_CHANNELS), lambda i: (i, 0)),
        pl.BlockSpec((tile, TIME_EMBED_DIM), lambda i: (i, 0)),
    ]
    # parameters: full-array blocks, same block for every grid step (stay resident)
    for p in kparams:
        in_specs.append(pl.BlockSpec(p.shape, lambda i, nd=p.ndim: (0,) * nd))
    out_specs = pl.BlockSpec((tile, OUT_CHANNELS), lambda i: (i, 0))

    kernel = functools.partial(simple_mlp_kernel, win_b.shape[0])
    out = pl.pallas_call(
        kernel,
        out_shape=jax.ShapeDtypeStruct((n_pad, OUT_CHANNELS), jnp.float32),
        grid_spec=pltpu.PrefetchScalarGridSpec(
            num_scalar_prefetch=0,
            grid=grid,
            in_specs=in_specs,
            out_specs=out_specs,
        ),
        compiler_params=pltpu.CompilerParams(
            dimension_semantics=("parallel",),      # shard batch tiles across TCs
            vmem_limit_bytes=32 * 1024 * 1024,      # > v5e's 16 MiB default, safe on v7x
        ),
    )(x_b, emb_b, *kparams)
    return out[:N]


def reference_forward(x4d, t, params):
    """Pure-JAX reference mirroring SimpleMLP.forward (same bf16-MXU / f32-accum policy)."""
    (wp, bp, wt1, bt1, wt2, bt2,
     ln1g, ln1b, win, bin_, wemb, bemb, ln2g, ln2b, wout, bout,
     lnfg, lnfb, wf, bf) = params
    bf16 = jnp.bfloat16

    def bdot(a, w):
        return jnp.dot(a.astype(bf16), w.astype(bf16), preferred_element_type=jnp.float32)

    N = x4d.shape[0]
    x = x4d.reshape(N, IN_CHANNELS)
    h = bdot(x, wp) + bp
    tf = timestep_embedding(t, FREQ_EMBED)
    te = _silu(tf @ wt1 + bt1) @ wt2 + bt2
    emb_act = _silu(te)
    for i in range(win.shape[0]):
        hh = bdot(_silu(_layernorm(h, ln1g[i], ln1b[i], 1e-5)), win[i]) + bin_[i]
        hh = hh + (bdot(emb_act, wemb[i]) + bemb[i])
        hh = bdot(_silu(_layernorm(hh, ln2g[i], ln2b[i], 1e-5)), wout[i]) + bout[i]
        h = h + hh
    return bdot(_silu(_layernorm(h, lnfg, lnfb, 1e-6)), wf) + bf


if __name__ == "__main__":
    key = jax.random.PRNGKey(0)
    k_x, k_t, k_p = jax.random.split(key, 3)

    N = 16
    x = jax.random.normal(k_x, (N, IN_CHANNELS, 1, 1), jnp.float32)  # NCHW, image_size=1
    t = jax.random.uniform(k_t, (N,), jnp.float32, 0.0, 1000.0)      # fractional timesteps
    c = None                                                         # use_context=False
    params = init_params(k_p)

    out = simple_mlp_pallas(x, t, params)
    out = jax.block_until_ready(out)

    ref = reference_forward(x, t, params)
    assert out.shape == (N, OUT_CHANNELS)
    max_err = float(jnp.max(jnp.abs(out - ref)))
    assert jnp.allclose(out, ref, rtol=1e-2, atol=1e-2), f"max abs err {max_err}"
    print("KERNEL_OK")
</pallas_src>

<mosaic_0001>
module attributes {stable_mosaic.version = 11 : i64} {
  func.func @simple_mlp_kernel(%arg0: i32, %arg1: memref<16x4xbf16, #tpu.memory_space<vmem>>, %arg2: memref<16x32xbf16, #tpu.memory_space<vmem>>, %arg3: memref<4x32xbf16, #tpu.memory_space<vmem>>, %arg4: memref<1x32xf32, #tpu.memory_space<vmem>>, %arg5: memref<2x1x32xf32, #tpu.memory_space<vmem>>, %arg6: memref<2x1x32xf32, #tpu.memory_space<vmem>>, %arg7: memref<2x32x64xbf16, #tpu.memory_space<vmem>>, %arg8: memref<2x32x64xbf16, #tpu.memory_space<vmem>>, %arg9: memref<2x1x64xf32, #tpu.memory_space<vmem>>, %arg10: memref<2x1x64xf32, #tpu.memory_space<vmem>>, %arg11: memref<2x1x64xf32, #tpu.memory_space<vmem>>, %arg12: memref<2x64x32xbf16, #tpu.memory_space<vmem>>, %arg13: memref<2x1x32xf32, #tpu.memory_space<vmem>>, %arg14: memref<1x32xf32, #tpu.memory_space<vmem>>, %arg15: memref<1x32xf32, #tpu.memory_space<vmem>>, %arg16: memref<32x4xbf16, #tpu.memory_space<vmem>>, %arg17: memref<1x4xf32, #tpu.memory_space<vmem>>, %arg18: memref<16x4xf32, #tpu.memory_space<vmem>>) attributes {dimension_semantics = [#tpu.dimension_semantics<parallel>], iteration_bounds = array<i64: 1>, scalar_prefetch = 0 : i64, scratch_operands = 0 : i64, tpu.core_type = #tpu.core_type<tc>, window_params = [{transform_indices = @transform_0, window_bounds = array<i64: 16, 4>}, {transform_indices = @transform_1, window_bounds = array<i64: 16, 32>}, {pipeline_mode = #tpu.pipeline_mode<synchronous>, transform_indices = @transform_2, window_bounds = array<i64: 4, 32>}, {pipeline_mode = #tpu.pipeline_mode<synchronous>, transform_indices = @transform_3, window_bounds = array<i64: 1, 32>}, {pipeline_mode = #tpu.pipeline_mode<synchronous>, transform_indices = @transform_4, window_bounds = array<i64: 2, 1, 32>}, {pipeline_mode = #tpu.pipeline_mode<synchronous>, transform_indices = @transform_5, window_bounds = array<i64: 2, 1, 32>}, {pipeline_mode = #tpu.pipeline_mode<synchronous>, transform_indices = @transform_6, window_bounds = array<i64: 2, 32, 64>}, {pipeline_mode = #tpu.pipeline_mode<synchronous>, transform_indices = @transform_7, window_bounds = array<i64: 2, 32, 64>}, {pipeline_mode = #tpu.pipeline_mode<synchronous>, transform_indices = @transform_8, window_bounds = array<i64: 2, 1, 64>}, {pipeline_mode = #tpu.pipeline_mode<synchronous>, transform_indices = @transform_9, window_bounds = array<i64: 2, 1, 64>}, {pipeline_mode = #tpu.pipeline_mode<synchronous>, transform_indices = @transform_10, window_bounds = array<i64: 2, 1, 64>}, {pipeline_mode = #tpu.pipeline_mode<synchronous>, transform_indices = @transform_11, window_bounds = array<i64: 2, 64, 32>}, {pipeline_mode = #tpu.pipeline_mode<synchronous>, transform_indices = @transform_12, window_bounds = array<i64: 2, 1, 32>}, {pipeline_mode = #tpu.pipeline_mode<synchronous>, transform_indices = @transform_13, window_bounds = array<i64: 1, 32>}, {pipeline_mode = #tpu.pipeline_mode<synchronous>, transform_indices = @transform_14, window_bounds = array<i64: 1, 32>}, {pipeline_mode = #tpu.pipeline_mode<synchronous>, transform_indices = @transform_15, window_bounds = array<i64: 32, 4>}, {pipeline_mode = #tpu.pipeline_mode<synchronous>, transform_indices = @transform_16, window_bounds = array<i64: 1, 4>}, {transform_indices = @transform_17, window_bounds = array<i64: 16, 4>}]} {
    %c0 = arith.constant 0 : index
    %c0_0 = arith.constant 0 : index
    %0 = vector.load %arg2[%c0, %c0_0] : memref<16x32xbf16, #tpu.memory_space<vmem>>, vector<16x32xbf16>
    %c0_1 = arith.constant 0 : index
    %c0_2 = arith.constant 0 : index
    %1 = vector.load %arg1[%c0_1, %c0_2] : memref<16x4xbf16, #tpu.memory_space<vmem>>, vector<16x4xbf16>
    %c0_3 = arith.constant 0 : index
    %c0_4 = arith.constant 0 : index
    %2 = vector.load %arg3[%c0_3, %c0_4] : memref<4x32xbf16, #tpu.memory_space<vmem>>, vector<4x32xbf16>
    %cst = arith.constant dense<0.000000e+00> : vector<16x32xf32>
    %3 = tpu.matmul %1, %2, %cst {dimension_numbers = #tpu.dot_dimension_numbers<[1], [0], [0], [1], [0, 0, 1, 1], [], []>} : vector<16x4xbf16>, vector<4x32xbf16>, vector<16x32xf32> -> vector<16x32xf32>
    %c0_5 = arith.constant 0 : index
    %c0_6 = arith.constant 0 : index
    %4 = vector.load %arg4[%c0_5, %c0_6] : memref<1x32xf32, #tpu.memory_space<vmem>>, vector<1x32xf32>
    %5 = vector.broadcast %4 : vector<1x32xf32> to vector<16x32xf32>
    %6 = arith.addf %3, %5 : vector<16x32xf32>
    %c0_7 = arith.constant 0 : index
    %c0_8 = arith.constant 0 : index
    %c0_9 = arith.constant 0 : index
    %7 = vector.load %arg5[%c0_7, %c0_8, %c0_9] : memref<2x1x32xf32, #tpu.memory_space<vmem>>, vector<1x1x32xf32>
    %8 = vector.shape_cast %7 : vector<1x1x32xf32> to vector<1x32xf32>
    %c0_10 = arith.constant 0 : index
    %c0_11 = arith.constant 0 : index
    %c0_12 = arith.constant 0 : index
    %9 = vector.load %arg6[%c0_10, %c0_11, %c0_12] : memref<2x1x32xf32, #tpu.memory_space<vmem>>, vector<1x1x32xf32>
    %10 = vector.shape_cast %9 : vector<1x1x32xf32> to vector<1x32xf32>
    %cst_13 = arith.constant dense<0.000000e+00> : vector<16xf32>
    %11 = vector.multi_reduction <add>, %6, %cst_13 [1] : vector<16x32xf32> to vector<16xf32>
    %12 = vector.shape_cast %11 : vector<16xf32> to vector<16x1xf32>
    %cst_14 = arith.constant 3.200000e+01 : f32
    %13 = vector.broadcast %cst_14 : f32 to vector<16x1xf32>
    %14 = arith.divf %12, %13 : vector<16x1xf32>
    %15 = arith.mulf %6, %6 : vector<16x32xf32>
    %cst_15 = arith.constant dense<0.000000e+00> : vector<16xf32>
    %16 = vector.multi_reduction <add>, %15, %cst_15 [1] : vector<16x32xf32> to vector<16xf32>
    %17 = vector.shape_cast %16 : vector<16xf32> to vector<16x1xf32>
    %cst_16 = arith.constant 3.200000e+01 : f32
    %18 = vector.broadcast %cst_16 : f32 to vector<16x1xf32>
    %19 = arith.divf %17, %18 : vector<16x1xf32>
    %20 = arith.mulf %14, %14 : vector<16x1xf32>
    %21 = arith.subf %19, %20 : vector<16x1xf32>
    %22 = vector.broadcast %14 : vector<16x1xf32> to vector<16x32xf32>
    %23 = arith.subf %6, %22 : vector<16x32xf32>
    %cst_17 = arith.constant 9.99999974E-6 : f32
    %24 = vector.broadcast %cst_17 : f32 to vector<16x1xf32>
    %25 = arith.addf %21, %24 : vector<16x1xf32>
    %26 = math.rsqrt %25 : vector<16x1xf32>
    %27 = vector.broadcast %26 : vector<16x1xf32> to vector<16x32xf32>
    %28 = arith.mulf %23, %27 : vector<16x32xf32>
    %29 = vector.broadcast %8 : vector<1x32xf32> to vector<16x32xf32>
    %30 = arith.mulf %28, %29 : vector<16x32xf32>
    %31 = vector.broadcast %10 : vector<1x32xf32> to vector<16x32xf32>
    %32 = arith.addf %30, %31 : vector<16x32xf32>
    %33 = arith.negf %32 : vector<16x32xf32>
    %34 = math.exp %33 : vector<16x32xf32>
    %cst_18 = arith.constant 1.000000e+00 : f32
    %35 = vector.broadcast %cst_18 : f32 to vector<16x32xf32>
    %36 = arith.addf %35, %34 : vector<16x32xf32>
    %37 = arith.divf %35, %36 : vector<16x32xf32>
    %38 = arith.mulf %32, %37 : vector<16x32xf32>
    %39 = arith.truncf %38 : vector<16x32xf32> to vector<16x32xbf16>
    %c0_19 = arith.constant 0 : index
    %c0_20 = arith.constant 0 : index
    %c0_21 = arith.constant 0 : index
    %40 = vector.load %arg7[%c0_19, %c0_20, %c0_21] : memref<2x32x64xbf16, #tpu.memory_space<vmem>>, vector<1x32x64xbf16>
    %41 = vector.shape_cast %40 : vector<1x32x64xbf16> to vector<32x64xbf16>
    %cst_22 = arith.constant dense<0.000000e+00> : vector<16x64xf32>
    %42 = tpu.matmul %39, %41, %cst_22 {dimension_numbers = #tpu.dot_dimension_numbers<[1], [0], [0], [1], [0, 0, 1, 1], [], []>} : vector<16x32xbf16>, vector<32x64xbf16>, vector<16x64xf32> -> vector<16x64xf32>
    %c0_23 = arith.constant 0 : index
    %c0_24 = arith.constant 0 : index
    %c0_25 = arith.constant 0 : index
    %43 = vector.load %arg8[%c0_23, %c0_24, %c0_25] : memref<2x32x64xbf16, #tpu.memory_space<vmem>>, vector<1x32x64xbf16>
    %44 = vector.shape_cast %43 : vector<1x32x64xbf16> to vector<32x64xbf16>
    %cst_26 = arith.constant dense<0.000000e+00> : vector<16x64xf32>
    %45 = tpu.matmul %0, %44, %cst_26 {dimension_numbers = #tpu.dot_dimension_numbers<[1], [0], [0], [1], [0, 0, 1, 1], [], []>} : vector<16x32xbf16>, vector<32x64xbf16>, vector<16x64xf32> -> vector<16x64xf32>
    %46 = arith.addf %42, %45 : vector<16x64xf32>
    %c0_27 = arith.constant 0 : index
    %c0_28 = arith.constant 0 : index
    %c0_29 = arith.constant 0 : index
    %47 = vector.load %arg9[%c0_27, %c0_28, %c0_29] : memref<2x1x64xf32, #tpu.memory_space<vmem>>, vector<1x1x64xf32>
    %48 = vector.shape_cast %47 : vector<1x1x64xf32> to vector<1x64xf32>
    %49 = vector.broadcast %48 : vector<1x64xf32> to vector<16x64xf32>
    %50 = arith.addf %46, %49 : vector<16x64xf32>
    %c0_30 = arith.constant 0 : index
    %c0_31 = arith.constant 0 : index
    %c0_32 = arith.constant 0 : index
    %51 = vector.load %arg10[%c0_30, %c0_31, %c0_32] : memref<2x1x64xf32, #tpu.memory_space<vmem>>, vector<1x1x64xf32>
    %52 = vector.shape_cast %51 : vector<1x1x64xf32> to vector<1x64xf32>
    %c0_33 = arith.constant 0 : index
    %c0_34 = arith.constant 0 : index
    %c0_35 = arith.constant 0 : index
    %53 = vector.load %arg11[%c0_33, %c0_34, %c0_35] : memref<2x1x64xf32, #tpu.memory_space<vmem>>, vector<1x1x64xf32>
    %54 = vector.shape_cast %53 : vector<1x1x64xf32> to vector<1x64xf32>
    %cst_36 = arith.constant dense<0.000000e+00> : vector<16xf32>
    %55 = vector.multi_reduction <add>, %50, %cst_36 [1] : vector<16x64xf32> to vector<16xf32>
    %56 = vector.shape_cast %55 : vector<16xf32> to vector<16x1xf32>
    %cst_37 = arith.constant 6.400000e+01 : f32
    %57 = vector.broadcast %cst_37 : f32 to vector<16x1xf32>
    %58 = arith.divf %56, %57 : vector<16x1xf32>
    %59 = arith.mulf %50, %50 : vector<16x64xf32>
    %cst_38 = arith.constant dense<0.000000e+00> : vector<16xf32>
    %60 = vector.multi_reduction <add>, %59, %cst_38 [1] : vector<16x64xf32> to vector<16xf32>
    %61 = vector.shape_cast %60 : vector<16xf32> to vector<16x1xf32>
    %cst_39 = arith.constant 6.400000e+01 : f32
    %62 = vector.broadcast %cst_39 : f32 to vector<16x1xf32>
    %63 = arith.divf %61, %62 : vector<16x1xf32>
    %64 = arith.mulf %58, %58 : vector<16x1xf32>
    %65 = arith.subf %63, %64 : vector<16x1xf32>
    %66 = vector.broadcast %58 : vector<16x1xf32> to vector<16x64xf32>
    %67 = arith.subf %50, %66 : vector<16x64xf32>
    %cst_40 = arith.constant 9.99999974E-6 : f32
    %68 = vector.broadcast %cst_40 : f32 to vector<16x1xf32>
    %69 = arith.addf %65, %68 : vector<16x1xf32>
    %70 = math.rsqrt %69 : vector<16x1xf32>
    %71 = vector.broadcast %70 : vector<16x1xf32> to vector<16x64xf32>
    %72 = arith.mulf %67, %71 : vector<16x64xf32>
    %73 = vector.broadcast %52 : vector<1x64xf32> to vector<16x64xf32>
    %74 = arith.mulf %72, %73 : vector<16x64xf32>
    %75 = vector.broadcast %54 : vector<1x64xf32> to vector<16x64xf32>
    %76 = arith.addf %74, %75 : vector<16x64xf32>
    %77 = arith.negf %76 : vector<16x64xf32>
    %78 = math.exp %77 : vector<16x64xf32>
    %cst_41 = arith.constant 1.000000e+00 : f32
    %79 = vector.broadcast %cst_41 : f32 to vector<16x64xf32>
    %80 = arith.addf %79, %78 : vector<16x64xf32>
    %81 = arith.divf %79, %80 : vector<16x64xf32>
    %82 = arith.mulf %76, %81 : vector<16x64xf32>
    %83 = arith.truncf %82 : vector<16x64xf32> to vector<16x64xbf16>
    %c0_42 = arith.constant 0 : index
    %c0_43 = arith.constant 0 : index
    %c0_44 = arith.constant 0 : index
    %84 = vector.load %arg12[%c0_42, %c0_43, %c0_44] : memref<2x64x32xbf16, #tpu.memory_space<vmem>>, vector<1x64x32xbf16>
    %85 = vector.shape_cast %84 : vector<1x64x32xbf16> to vector<64x32xbf16>
    %cst_45 = arith.constant dense<0.000000e+00> : vector<16x32xf32>
    %86 = tpu.matmul %83, %85, %cst_45 {dimension_numbers = #tpu.dot_dimension_numbers<[1], [0], [0], [1], [0, 0, 1, 1], [], []>} : vector<16x64xbf16>, vector<64x32xbf16>, vector<16x32xf32> -> vector<16x32xf32>
    %c0_46 = arith.constant 0 : index
    %c0_47 = arith.constant 0 : index
    %c0_48 = arith.constant 0 : index
    %87 = vector.load %arg13[%c0_46, %c0_47, %c0_48] : memref<2x1x32xf32, #tpu.memory_space<vmem>>, vector<1x1x32xf32>
    %88 = vector.shape_cast %87 : vector<1x1x32xf32> to vector<1x32xf32>
    %89 = vector.broadcast %88 : vector<1x32xf32> to vector<16x32xf32>
    %90 = arith.addf %86, %89 : vector<16x32xf32>
    %91 = arith.addf %6, %90 : vector<16x32xf32>
    %c1 = arith.constant 1 : index
    %c0_49 = arith.constant 0 : index
    %c0_50 = arith.constant 0 : index
    %92 = vector.load %arg5[%c1, %c0_49, %c0_50] : memref<2x1x32xf32, #tpu.memory_space<vmem>>, vector<1x1x32xf32>
    %93 = vector.shape_cast %92 : vector<1x1x32xf32> to vector<1x32xf32>
    %c1_51 = arith.constant 1 : index
    %c0_52 = arith.constant 0 : index
    %c0_53 = arith.constant 0 : index
    %94 = vector.load %arg6[%c1_51, %c0_52, %c0_53] : memref<2x1x32xf32, #tpu.memory_space<vmem>>, vector<1x1x32xf32>
    %95 = vector.shape_cast %94 : vector<1x1x32xf32> to vector<1x32xf32>
    %cst_54 = arith.constant dense<0.000000e+00> : vector<16xf32>
    %96 = vector.multi_reduction <add>, %91, %cst_54 [1] : vector<16x32xf32> to vector<16xf32>
    %97 = vector.shape_cast %96 : vector<16xf32> to vector<16x1xf32>
    %cst_55 = arith.constant 3.200000e+01 : f32
    %98 = vector.broadcast %cst_55 : f32 to vector<16x1xf32>
    %99 = arith.divf %97, %98 : vector<16x1xf32>
    %100 = arith.mulf %91, %91 : vector<16x32xf32>
    %cst_56 = arith.constant dense<0.000000e+00> : vector<16xf32>
    %101 = vector.multi_reduction <add>, %100, %cst_56 [1] : vector<16x32xf32> to vector<16xf32>
    %102 = vector.shape_cast %101 : vector<16xf32> to vector<16x1xf32>
    %cst_57 = arith.constant 3.200000e+01 : f32
    %103 = vector.broadcast %cst_57 : f32 to vector<16x1xf32>
    %104 = arith.divf %102, %103 : vector<16x1xf32>
    %105 = arith.mulf %99, %99 : vector<16x1xf32>
    %106 = arith.subf %104, %105 : vector<16x1xf32>
    %107 = vector.broadcast %99 : vector<16x1xf32> to vector<16x32xf32>
    %108 = arith.subf %91, %107 : vector<16x32xf32>
    %cst_58 = arith.constant 9.99999974E-6 : f32
    %109 = vector.broadcast %cst_58 : f32 to vector<16x1xf32>
    %110 = arith.addf %106, %109 : vector<16x1xf32>
    %111 = math.rsqrt %110 : vector<16x1xf32>
    %112 = vector.broadcast %111 : vector<16x1xf32> to vector<16x32xf32>
    %113 = arith.mulf %108, %112 : vector<16x32xf32>
    %114 = vector.broadcast %93 : vector<1x32xf32> to vector<16x32xf32>
    %115 = arith.mulf %113, %114 : vector<16x32xf32>
    %116 = vector.broadcast %95 : vector<1x32xf32> to vector<16x32xf32>
    %117 = arith.addf %115, %116 : vector<16x32xf32>
    %118 = arith.negf %117 : vector<16x32xf32>
    %119 = math.exp %118 : vector<16x32xf32>
    %cst_59 = arith.constant 1.000000e+00 : f32
    %120 = vector.broadcast %cst_59 : f32 to vector<16x32xf32>
    %121 = arith.addf %120, %119 : vector<16x32xf32>
    %122 = arith.divf %120, %121 : vector<16x32xf32>
    %123 = arith.mulf %117, %122 : vector<16x32xf32>
    %124 = arith.truncf %123 : vector<16x32xf32> to vector<16x32xbf16>
    %c1_60 = arith.constant 1 : index
    %c0_61 = arith.constant 0 : index
    %c0_62 = arith.constant 0 : index
    %125 = vector.load %arg7[%c1_60, %c0_61, %c0_62] : memref<2x32x64xbf16, #tpu.memory_space<vmem>>, vector<1x32x64xbf16>
    %126 = vector.shape_cast %125 : vector<1x32x64xbf16> to vector<32x64xbf16>
    %cst_63 = arith.constant dense<0.000000e+00> : vector<16x64xf32>
    %127 = tpu.matmul %124, %126, %cst_63 {dimension_numbers = #tpu.dot_dimension_numbers<[1], [0], [0], [1], [0, 0, 1, 1], [], []>} : vector<16x32xbf16>, vector<32x64xbf16>, vector<16x64xf32> -> vector<16x64xf32>
    %c1_64 = arith.constant 1 : index
    %c0_65 = arith.constant 0 : index
    %c0_66 = arith.constant 0 : index
    %128 = vector.load %arg8[%c1_64, %c0_65, %c0_66] : memref<2x32x64xbf16, #tpu.memory_space<vmem>>, vector<1x32x64xbf16>
    %129 = vector.shape_cast %128 : vector<1x32x64xbf16> to vector<32x64xbf16>
    %cst_67 = arith.constant dense<0.000000e+00> : vector<16x64xf32>
    %130 = tpu.matmul %0, %129, %cst_67 {dimension_numbers = #tpu.dot_dimension_numbers<[1], [0], [0], [1], [0, 0, 1, 1], [], []>} : vector<16x32xbf16>, vector<32x64xbf16>, vector<16x64xf32> -> vector<16x64xf32>
    %131 = arith.addf %127, %130 : vector<16x64xf32>
    %c1_68 = arith.constant 1 : index
    %c0_69 = arith.constant 0 : index
    %c0_70 = arith.constant 0 : index
    %132 = vector.load %arg9[%c1_68, %c0_69, %c0_70] : memref<2x1x64xf32, #tpu.memory_space<vmem>>, vector<1x1x64xf32>
    %133 = vector.shape_cast %132 : vector<1x1x64xf32> to vector<1x64xf32>
    %134 = vector.broadcast %133 : vector<1x64xf32> to vector<16x64xf32>
    %135 = arith.addf %131, %134 : vector<16x64xf32>
    %c1_71 = arith.constant 1 : index
    %c0_72 = arith.constant 0 : index
    %c0_73 = arith.constant 0 : index
    %136 = vector.load %arg10[%c1_71, %c0_72, %c0_73] : memref<2x1x64xf32, #tpu.memory_space<vmem>>, vector<1x1x64xf32>
    %137 = vector.shape_cast %136 : vector<1x1x64xf32> to vector<1x64xf32>
    %c1_74 = arith.constant 1 : index
    %c0_75 = arith.constant 0 : index
    %c0_76 = arith.constant 0 : index
    %138 = vector.load %arg11[%c1_74, %c0_75, %c0_76] : memref<2x1x64xf32, #tpu.memory_space<vmem>>, vector<1x1x64xf32>
    %139 = vector.shape_cast %138 : vector<1x1x64xf32> to vector<1x64xf32>
    %cst_77 = arith.constant dense<0.000000e+00> : vector<16xf32>
    %140 = vector.multi_reduction <add>, %135, %cst_77 [1] : vector<16x64xf32> to vector<16xf32>
    %141 = vector.shape_cast %140 : vector<16xf32> to vector<16x1xf32>
    %cst_78 = arith.constant 6.400000e+01 : f32
    %142 = vector.broadcast %cst_78 : f32 to vector<16x1xf32>
    %143 = arith.divf %141, %142 : vector<16x1xf32>
    %144 = arith.mulf %135, %135 : vector<16x64xf32>
    %cst_79 = arith.constant dense<0.000000e+00> : vector<16xf32>
    %145 = vector.multi_reduction <add>, %144, %cst_79 [1] : vector<16x64xf32> to vector<16xf32>
    %146 = vector.shape_cast %145 : vector<16xf32> to vector<16x1xf32>
    %cst_80 = arith.constant 6.400000e+01 : f32
    %147 = vector.broadcast %cst_80 : f32 to vector<16x1xf32>
    %148 = arith.divf %146, %147 : vector<16x1xf32>
    %149 = arith.mulf %143, %143 : vector<16x1xf32>
    %150 = arith.subf %148, %149 : vector<16x1xf32>
    %151 = vector.broadcast %143 : vector<16x1xf32> to vector<16x64xf32>
    %152 = arith.subf %135, %151 : vector<16x64xf32>
    %cst_81 = arith.constant 9.99999974E-6 : f32
    %153 = vector.broadcast %cst_81 : f32 to vector<16x1xf32>
    %154 = arith.addf %150, %153 : vector<16x1xf32>
    %155 = math.rsqrt %154 : vector<16x1xf32>
    %156 = vector.broadcast %155 : vector<16x1xf32> to vector<16x64xf32>
    %157 = arith.mulf %152, %156 : vector<16x64xf32>
    %158 = vector.broadcast %137 : vector<1x64xf32> to vector<16x64xf32>
    %159 = arith.mulf %157, %158 : vector<16x64xf32>
    %160 = vector.broadcast %139 : vector<1x64xf32> to vector<16x64xf32>
    %161 = arith.addf %159, %160 : vector<16x64xf32>
    %162 = arith.negf %161 : vector<16x64xf32>
    %163 = math.exp %162 : vector<16x64xf32>
    %cst_82 = arith.constant 1.000000e+00 : f32
    %164 = vector.broadcast %cst_82 : f32 to vector<16x64xf32>
    %165 = arith.addf %164, %163 : vector<16x64xf32>
    %166 = arith.divf %164, %165 : vector<16x64xf32>
    %167 = arith.mulf %161, %166 : vector<16x64xf32>
    %168 = arith.truncf %167 : vector<16x64xf32> to vector<16x64xbf16>
    %c1_83 = arith.constant 1 : index
    %c0_84 = arith.constant 0 : index
    %c0_85 = arith.constant 0 : index
    %169 = vector.load %arg12[%c1_83, %c0_84, %c0_85] : memref<2x64x32xbf16, #tpu.memory_space<vmem>>, vector<1x64x32xbf16>
    %170 = vector.shape_cast %169 : vector<1x64x32xbf16> to vector<64x32xbf16>
    %cst_86 = arith.constant dense<0.000000e+00> : vector<16x32xf32>
    %171 = tpu.matmul %168, %170, %cst_86 {dimension_numbers = #tpu.dot_dimension_numbers<[1], [0], [0], [1], [0, 0, 1, 1], [], []>} : vector<16x64xbf16>, vector<64x32xbf16>, vector<16x32xf32> -> vector<16x32xf32>
    %c1_87 = arith.constant 1 : index
    %c0_88 = arith.constant 0 : index
    %c0_89 = arith.constant 0 : index
    %172 = vector.load %arg13[%c1_87, %c0_88, %c0_89] : memref<2x1x32xf32, #tpu.memory_space<vmem>>, vector<1x1x32xf32>
    %173 = vector.shape_cast %172 : vector<1x1x32xf32> to vector<1x32xf32>
    %174 = vector.broadcast %173 : vector<1x32xf32> to vector<16x32xf32>
    %175 = arith.addf %171, %174 : vector<16x32xf32>
    %176 = arith.addf %91, %175 : vector<16x32xf32>
    %c0_90 = arith.constant 0 : index
    %c0_91 = arith.constant 0 : index
    %177 = vector.load %arg14[%c0_90, %c0_91] : memref<1x32xf32, #tpu.memory_space<vmem>>, vector<1x32xf32>
    %c0_92 = arith.constant 0 : index
    %c0_93 = arith.constant 0 : index
    %178 = vector.load %arg15[%c0_92, %c0_93] : memref<1x32xf32, #tpu.memory_space<vmem>>, vector<1x32xf32>
    %cst_94 = arith.constant dense<0.000000e+00> : vector<16xf32>
    %179 = vector.multi_reduction <add>, %176, %cst_94 [1] : vector<16x32xf32> to vector<16xf32>
    %180 = vector.shape_cast %179 : vector<16xf32> to vector<16x1xf32>
    %cst_95 = arith.constant 3.200000e+01 : f32
    %181 = vector.broadcast %cst_95 : f32 to vector<16x1xf32>
    %182 = arith.divf %180, %181 : vector<16x1xf32>
    %183 = arith.mulf %176, %176 : vector<16x32xf32>
    %cst_96 = arith.constant dense<0.000000e+00> : vector<16xf32>
    %184 = vector.multi_reduction <add>, %183, %cst_96 [1] : vector<16x32xf32> to vector<16xf32>
    %185 = vector.shape_cast %184 : vector<16xf32> to vector<16x1xf32>
    %cst_97 = arith.constant 3.200000e+01 : f32
    %186 = vector.broadcast %cst_97 : f32 to vector<16x1xf32>
    %187 = arith.divf %185, %186 : vector<16x1xf32>
    %188 = arith.mulf %182, %182 : vector<16x1xf32>
    %189 = arith.subf %187, %188 : vector<16x1xf32>
    %190 = vector.broadcast %182 : vector<16x1xf32> to vector<16x32xf32>
    %191 = arith.subf %176, %190 : vector<16x32xf32>
    %cst_98 = arith.constant 9.99999997E-7 : f32
    %192 = vector.broadcast %cst_98 : f32 to vector<16x1xf32>
    %193 = arith.addf %189, %192 : vector<16x1xf32>
    %194 = math.rsqrt %193 : vector<16x1xf32>
    %195 = vector.broadcast %194 : vector<16x1xf32> to vector<16x32xf32>
    %196 = arith.mulf %191, %195 : vector<16x32xf32>
    %197 = vector.broadcast %177 : vector<1x32xf32> to vector<16x32xf32>
    %198 = arith.mulf %196, %197 : vector<16x32xf32>
    %199 = vector.broadcast %178 : vector<1x32xf32> to vector<16x32xf32>
    %200 = arith.addf %198, %199 : vector<16x32xf32>
    %201 = arith.negf %200 : vector<16x32xf32>
    %202 = math.exp %201 : vector<16x32xf32>
    %cst_99 = arith.constant 1.000000e+00 : f32
    %203 = vector.broadcast %cst_99 : f32 to vector<16x32xf32>
    %204 = arith.addf %203, %202 : vector<16x32xf32>
    %205 = arith.divf %203, %204 : vector<16x32xf32>
    %206 = arith.mulf %200, %205 : vector<16x32xf32>
    %207 = arith.truncf %206 : vector<16x32xf32> to vector<16x32xbf16>
    %c0_100 = arith.constant 0 : index
    %c0_101 = arith.constant 0 : index
    %208 = vector.load %arg16[%c0_100, %c0_101] : memref<32x4xbf16, #tpu.memory_space<vmem>>, vector<32x4xbf16>
    %cst_102 = arith.constant dense<0.000000e+00> : vector<16x4xf32>
    %209 = tpu.matmul %207, %208, %cst_102 {dimension_numbers = #tpu.dot_dimension_numbers<[1], [0], [0], [1], [0, 0, 1, 1], [], []>} : vector<16x32xbf16>, vector<32x4xbf16>, vector<16x4xf32> -> vector<16x4xf32>
    %c0_103 = arith.constant 0 : index
    %c0_104 = arith.constant 0 : index
    %210 = vector.load %arg17[%c0_103, %c0_104] : memref<1x4xf32, #tpu.memory_space<vmem>>, vector<1x4xf32>
    %211 = vector.broadcast %210 : vector<1x4xf32> to vector<16x4xf32>
    %212 = arith.addf %209, %211 : vector<16x4xf32>
    %c0_105 = arith.constant 0 : index
    %c0_106 = arith.constant 0 : index
    %213 = vector.load %arg18[%c0_105, %c0_106] : memref<16x4xf32, #tpu.memory_space<vmem>>, vector<16x4xf32>
    tpu.vector_store %arg18[%c0_105, %c0_106], %212 {strides = array<i32>} : memref<16x4xf32, #tpu.memory_space<vmem>>, vector<16x4xf32>,
    return
  }
  func.func @transform_0(%arg0: i32) -> (i32, i32) {
    %c0_i32 = arith.constant 0 : i32
    %c0_i32_0 = arith.constant 0 : i32
    return %arg0, %c0_i32 : i32, i32
  }
  func.func @transform_1(%arg0: i32) -> (i32, i32) {
    %c0_i32 = arith.constant 0 : i32
    %c0_i32_0 = arith.constant 0 : i32
    return %arg0, %c0_i32 : i32, i32
  }
  func.func @transform_2(%arg0: i32) -> (i32, i32) {
    %c0_i32 = arith.constant 0 : i32
    %c0_i32_0 = arith.constant 0 : i32
    %c0_i32_1 = arith.constant 0 : i32
    return %c0_i32, %c0_i32_0 : i32, i32
  }
  func.func @transform_3(%arg0: i32) -> (i32, i32) {
    %c0_i32 = arith.constant 0 : i32
    %c0_i32_0 = arith.constant 0 : i32
    %c0_i32_1 = arith.constant 0 : i32
    return %c0_i32, %c0_i32_0 : i32, i32
  }
  func.func @transform_4(%arg0: i32) -> (i32, i32, i32) {
    %c0_i32 = arith.constant 0 : i32
    %c0_i32_0 = arith.constant 0 : i32
    %c0_i32_1 = arith.constant 0 : i32
    %c0_i32_2 = arith.constant 0 : i32
    return %c0_i32, %c0_i32_0, %c0_i32_1 : i32, i32, i32
  }
  func.func @transform_5(%arg0: i32) -> (i32, i32, i32) {
    %c0_i32 = arith.constant 0 : i32
    %c0_i32_0 = arith.constant 0 : i32
    %c0_i32_1 = arith.constant 0 : i32
    %c0_i32_2 = arith.constant 0 : i32
    return %c0_i32, %c0_i32_0, %c0_i32_1 : i32, i32, i32
  }
  func.func @transform_6(%arg0: i32) -> (i32, i32, i32) {
    %c0_i32 = arith.constant 0 : i32
    %c0_i32_0 = arith.constant 0 : i32
    %c0_i32_1 = arith.constant 0 : i32
    %c0_i32_2 = arith.constant 0 : i32
    return %c0_i32, %c0_i32_0, %c0_i32_1 : i32, i32, i32
  }
  func.func @transform_7(%arg0: i32) -> (i32, i32, i32) {
    %c0_i32 = arith.constant 0 : i32
    %c0_i32_0 = arith.constant 0 : i32
    %c0_i32_1 = arith.constant 0 : i32
    %c0_i32_2 = arith.constant 0 : i32
    return %c0_i32, %c0_i32_0, %c0_i32_1 : i32, i32, i32
  }
  func.func @transform_8(%arg0: i32) -> (i32, i32, i32) {
    %c0_i32 = arith.constant 0 : i32
    %c0_i32_0 = arith.constant 0 : i32
    %c0_i32_1 = arith.constant 0 : i32
    %c0_i32_2 = arith.constant 0 : i32
    return %c0_i32, %c0_i32_0, %c0_i32_1 : i32, i32, i32
  }
  func.func @transform_9(%arg0: i32) -> (i32, i32, i32) {
    %c0_i32 = arith.constant 0 : i32
    %c0_i32_0 = arith.constant 0 : i32
    %c0_i32_1 = arith.constant 0 : i32
    %c0_i32_2 = arith.constant 0 : i32
    return %c0_i32, %c0_i32_0, %c0_i32_1 : i32, i32, i32
  }
  func.func @transform_10(%arg0: i32) -> (i32, i32, i32) {
    %c0_i32 = arith.constant 0 : i32
    %c0_i32_0 = arith.constant 0 : i32
    %c0_i32_1 = arith.constant 0 : i32
    %c0_i32_2 = arith.constant 0 : i32
    return %c0_i32, %c0_i32_0, %c0_i32_1 : i32, i32, i32
  }
  func.func @transform_11(%arg0: i32) -> (i32, i32, i32) {
    %c0_i32 = arith.constant 0 : i32
    %c0_i32_0 = arith.constant 0 : i32
    %c0_i32_1 = arith.constant 0 : i32
    %c0_i32_2 = arith.constant 0 : i32
    return %c0_i32, %c0_i32_0, %c0_i32_1 : i32, i32, i32
  }
  func.func @transform_12(%arg0: i32) -> (i32, i32, i32) {
    %c0_i32 = arith.constant 0 : i32
    %c0_i32_0 = arith.constant 0 : i32
    %c0_i32_1 = arith.constant 0 : i32
    %c0_i32_2 = arith.constant 0 : i32
    return %c0_i32, %c0_i32_0, %c0_i32_1 : i32, i32, i32
  }
  func.func @transform_13(%arg0: i32) -> (i32, i32) {
    %c0_i32 = arith.constant 0 : i32
    %c0_i32_0 = arith.constant 0 : i32
    %c0_i32_1 = arith.constant 0 : i32
    return %c0_i32, %c0_i32_0 : i32, i32
  }
  func.func @transform_14(%arg0: i32) -> (i32, i32) {
    %c0_i32 = arith.constant 0 : i32
    %c0_i32_0 = arith.constant 0 : i32
    %c0_i32_1 = arith.constant 0 : i32
    return %c0_i32, %c0_i32_0 : i32, i32
  }
  func.func @transform_15(%arg0: i32) -> (i32, i32) {
    %c0_i32 = arith.constant 0 : i32
    %c0_i32_0 = arith.constant 0 : i32
    %c0_i32_1 = arith.constant 0 : i32
    return %c0_i32, %c0_i32_0 : i32, i32
  }
  func.func @transform_16(%arg0: i32) -> (i32, i32) {
    %c0_i32 = arith.constant 0 : i32
    %c0_i32_0 = arith.constant 0 : i32
    %c0_i32_1 = arith.constant 0 : i32
    return %c0_i32, %c0_i32_0 : i32, i32
  }
  func.func @transform_17(%arg0: i32) -> (i32, i32) {
    %c0_i32 = arith.constant 0 : i32
    %c0_i32_0 = arith.constant 0 : i32
    return %arg0, %c0_i32 : i32, i32
  }
}

</mosaic_0001>

<llo_original>
// kernel: tpu_custom_call.1
$region0: #{tpu_custom_call.1}
  #allocation0 [shape = 'u32[]', space=smem, size = 0x4, offset = 0x4, fixed_abs, tag = 'smem constant byte address 0x4 - core index']
  #allocation1 [shape = 'u32[144,128]{1,0:T(1,128)}', space=vmem, size = 0x12000, scoped, tag = 'internal scratch']
  %s0 = inlined_call_operand.vmem [shape: bf16[16,4], index: 0, kind: input, shape index: {}]
  %s1 = inlined_call_operand.vmem [shape: bf16[16,32], index: 1, kind: input, shape index: {}]
  %s2 = inlined_call_operand.vmem [shape: bf16[4,32], index: 2, kind: input, shape index: {}]
  %s3 = inlined_call_operand.vmem [shape: f32[1,32], index: 3, kind: input, shape index: {}]
  %s4 = inlined_call_operand.vmem [shape: f32[2,1,32], index: 4, kind: input, shape index: {}]
  %s5 = inlined_call_operand.vmem [shape: f32[2,1,32], index: 5, kind: input, shape index: {}]
  %s6 = inlined_call_operand.vmem [shape: bf16[2,32,64], index: 6, kind: input, shape index: {}]
  %s7 = inlined_call_operand.vmem [shape: bf16[2,32,64], index: 7, kind: input, shape index: {}]
  %s8 = inlined_call_operand.vmem [shape: f32[2,1,64], index: 8, kind: input, shape index: {}]
  %s9 = inlined_call_operand.vmem [shape: f32[2,1,64], index: 9, kind: input, shape index: {}]
  %s10 = inlined_call_operand.vmem [shape: f32[2,1,64], index: 10, kind: input, shape index: {}]
  %s11 = inlined_call_operand.vmem [shape: bf16[2,64,32], index: 11, kind: input, shape index: {}]
  %s12 = inlined_call_operand.vmem [shape: f32[2,1,32], index: 12, kind: input, shape index: {}]
  %s13 = inlined_call_operand.vmem [shape: f32[1,32], index: 13, kind: input, shape index: {}]
  %s14 = inlined_call_operand.vmem [shape: f32[1,32], index: 14, kind: input, shape index: {}]
  %s15 = inlined_call_operand.vmem [shape: bf16[32,4], index: 15, kind: input, shape index: {}]
  %s16 = inlined_call_operand.vmem [shape: f32[1,4], index: 16, kind: input, shape index: {}]
  %s17 = inlined_call_operand.vmem [shape: f32[16,4], index: 17, kind: output, shape index: {}]
  %s18 = sld [smem:[#allocation0]]
  $region78: #{tpu_custom_call.1} parent=0
    _
  %s20 = ssub.s32 1, %s18
  %s21 = scalar_select 0, %s20, %s18
  // Predicated region
  $region2: #{tpu_custom_call.1} parent=0 // pred_check
    _
  $region3: #{tpu_custom_call.1} parent=0 // pred_check_branch
    %23 = sbr.rel (0) target = $region5
  $region4: #{tpu_custom_call.1} parent=0 // pred_region
    _
  $region5: #{tpu_custom_call.1} parent=0 // pred_fallthru
    _
  // Predicated region
  $region6: #{tpu_custom_call.1} parent=0 // pred_check
    _
  $region7: #{tpu_custom_call.1} parent=0 // pred_check_branch
    %25 = sbr.rel (0) target = $region9
  $region8: #{tpu_custom_call.1} parent=0 // pred_region
    _
  $region9: #{tpu_custom_call.1} parent=0 // pred_fallthru
    _
  // Predicated region
  $region10: #{tpu_custom_call.1} parent=0 // pred_check
    _
  $region11: #{tpu_custom_call.1} parent=0 // pred_check_branch
    %27 = sbr.rel (0) target = $region13
  $region12: #{tpu_custom_call.1} parent=0 // pred_region
    _
  $region13: #{tpu_custom_call.1} parent=0 // pred_fallthru
    _
  // Predicated region
  $region14: #{tpu_custom_call.1} parent=0 // pred_check
    _
  $region15: #{tpu_custom_call.1} parent=0 // pred_check_branch
    %29 = sbr.rel (0) target = $region17
  $region16: #{tpu_custom_call.1} parent=0 // pred_region
    _
  $region17: #{tpu_custom_call.1} parent=0 // pred_fallthru
    _
  // Predicated region
  $region18: #{tpu_custom_call.1} parent=0 // pred_check
    _
  $region19: #{tpu_custom_call.1} parent=0 // pred_check_branch
    %31 = sbr.rel (0) target = $region21
  $region20: #{tpu_custom_call.1} parent=0 // pred_region
    _
  $region21: #{tpu_custom_call.1} parent=0 // pred_fallthru
    _
  // Predicated region
  $region22: #{tpu_custom_call.1} parent=0 // pred_check
    _
  $region23: #{tpu_custom_call.1} parent=0 // pred_check_branch
    %33 = sbr.rel (0) target = $region25
  $region24: #{tpu_custom_call.1} parent=0 // pred_region
    _
  $region25: #{tpu_custom_call.1} parent=0 // pred_fallthru
    _
  // Predicated region
  $region26: #{tpu_custom_call.1} parent=0 // pred_check
    _
  $region27: #{tpu_custom_call.1} parent=0 // pred_check_branch
    %35 = sbr.rel (0) target = $region29
  $region28: #{tpu_custom_call.1} parent=0 // pred_region
    _
  $region29: #{tpu_custom_call.1} parent=0 // pred_fallthru
    _
  // Predicated region
  $region30: #{tpu_custom_call.1} parent=0 // pred_check
    _
  $region31: #{tpu_custom_call.1} parent=0 // pred_check_branch
    %37 = sbr.rel (0) target = $region33
  $region32: #{tpu_custom_call.1} parent=0 // pred_region
    _
  $region33: #{tpu_custom_call.1} parent=0 // pred_fallthru
    _
  // Predicated region
  $region34: #{tpu_custom_call.1} parent=0 // pred_check
    _
  $region35: #{tpu_custom_call.1} parent=0 // pred_check_branch
    %39 = sbr.rel (0) target = $region37
  $region36: #{tpu_custom_call.1} parent=0 // pred_region
    _
  $region37: #{tpu_custom_call.1} parent=0 // pred_fallthru
    _
  // Predicated region
  $region38: #{tpu_custom_call.1} parent=0 // pred_check
    _
  $region39: #{tpu_custom_call.1} parent=0 // pred_check_branch
    %41 = sbr.rel (0) target = $region41
  $region40: #{tpu_custom_call.1} parent=0 // pred_region
    _
  $region41: #{tpu_custom_call.1} parent=0 // pred_fallthru
    _
  // Predicated region
  $region42: #{tpu_custom_call.1} parent=0 // pred_check
    _
  $region43: #{tpu_custom_call.1} parent=0 // pred_check_branch
    %43 = sbr.rel (0) target = $region45
  $region44: #{tpu_custom_call.1} parent=0 // pred_region
    _
  $region45: #{tpu_custom_call.1} parent=0 // pred_fallthru
    _
  // Predicated region
  $region46: #{tpu_custom_call.1} parent=0 // pred_check
    _
  $region47: #{tpu_custom_call.1} parent=0 // pred_check_branch
    %45 = sbr.rel (0) target = $region49
  $region48: #{tpu_custom_call.1} parent=0 // pred_region
    _
  $region49: #{tpu_custom_call.1} parent=0 // pred_fallthru
    _
  // Predicated region
  $region50: #{tpu_custom_call.1} parent=0 // pred_check
    _
  $region51: #{tpu_custom_call.1} parent=0 // pred_check_branch
    %47 = sbr.rel (0) target = $region53
  $region52: #{tpu_custom_call.1} parent=0 // pred_region
    _
  $region53: #{tpu_custom_call.1} parent=0 // pred_fallthru
    _
  // Predicated region
  $region54: #{tpu_custom_call.1} parent=0 // pred_check
    _
  $region55: #{tpu_custom_call.1} parent=0 // pred_check_branch
    %49 = sbr.rel (0) target = $region57
  $region56: #{tpu_custom_call.1} parent=0 // pred_region
    _
  $region57: #{tpu_custom_call.1} parent=0 // pred_fallthru
    _
  // Predicated region
  $region58: #{tpu_custom_call.1} parent=0 // pred_check
    _
  $region59: #{tpu_custom_call.1} parent=0 // pred_check_branch
    %51 = sbr.rel (0) target = $region61
  $region60: #{tpu_custom_call.1} parent=0 // pred_region
    _
  $region61: #{tpu_custom_call.1} parent=0 // pred_fallthru
    _
  // Predicated region
  $region62: #{tpu_custom_call.1} parent=0 // pred_check
    _
  $region63: #{tpu_custom_call.1} parent=0 // pred_check_branch
    %53 = sbr.rel (0) target = $region65
  $region64: #{tpu_custom_call.1} parent=0 // pred_region
    _
  $region65: #{tpu_custom_call.1} parent=0 // pred_fallthru
    _
  // Predicated region
  $region66: #{tpu_custom_call.1} parent=0 // pred_check
    _
  $region67: #{tpu_custom_call.1} parent=0 // pred_check_branch
    %55 = sbr.rel (0) target = $region69
  $region68: #{tpu_custom_call.1} parent=0 // pred_region
    _
  $region69: #{tpu_custom_call.1} parent=0 // pred_fallthru
    _
  %v57 = vld [vmem:[%s1] sm:$0xf]
  %v58 = vld [vmem:[%s1 + $0x4] sm:$0xf]
  %v59 = vld [vmem:[%s0] sm:$0xf]
  %v60 = vld [vmem:[%s0 + $0x4] sm:$0xf]
  %v61 = vld [vmem:[%s2] sm:$0x3]
  %v62 = vld [vmem:[%s3] sm:$0x1]
  %v64 = vlaneseq
  %v65 = vshrl.u32 %v64, 7
  %v66 = vsub.s32 0, %v65
  %v67 = vrot.slane %v62, %v66
  %v71 = vunpack.c.l.b16 %v59
  %v72 = vunpack.c.l.b16 %v60
  %v73 = vpack.c.b16 %v72, %v71
  %vm74 = vcmask 31744
  %v76 = vsel %vm74, %v73, 0
  %vm78 = vcmask 1041408
  %v80 = vsel %vm78, %v61, 0
  %82 = vmatprep.subr.bf16.mxu0 0
  %83 = vmatpush1.bf16.msra.mxu0 %v80
  %84 = vmatprep.subr.bf16.mxu0 0
  %85 = vmatpush1.bf16.msra.mxu0 0
  %86 = vmatprep.subr.bf16.mxu0 0
  %87 = vmatpush1.bf16.msra.mxu0 0
  %88 = vmatprep.subr.bf16.mxu0 0
  %89 = vmatpush1.bf16.msra.mxu0 0
  %90 = vmatprep.subr.bf16.mxu0 0
  %91 = vmatpush1.bf16.msra.mxu0 0
  %92 = vmatprep.subr.bf16.mxu0 0
  %93 = vmatpush1.bf16.msra.mxu0 0
  %94 = vmatprep.subr.bf16.mxu0 0
  %95 = vmatpush1.bf16.msra.mxu0 0
  %96 = vmatprep.subr.bf16.mxu0 0
  %97 = vmatpush1.bf16.msra.mxu0 0
  %98 = vmatprep.subr.bf16.mxu0 0
  %99 = vmatpush1.bf16.msra.mxu0 0
  %100 = vmatprep.subr.bf16.mxu0 0
  %101 = vmatpush1.bf16.msra.mxu0 0
  %102 = vmatprep.subr.bf16.mxu0 0
  %103 = vmatpush1.bf16.msra.mxu0 0
  %104 = vmatprep.subr.bf16.mxu0 0
  %105 = vmatpush1.bf16.msra.mxu0 0
  %106 = vmatprep.subr.bf16.mxu0 0
  %107 = vmatpush1.bf16.msra.mxu0 0
  %108 = vmatprep.subr.bf16.mxu0 0
  %109 = vmatpush1.bf16.msra.mxu0 0
  %110 = vmatprep.subr.bf16.mxu0 0
  %111 = vmatpush1.bf16.msra.mxu0 0
  %112 = vmatprep.subr.bf16.mxu0 0
  %113 = vmatpush1.bf16.msra.mxu0 0
  %114 = vmatprep.mubr.bf16.mxu0 0
  %115 = vmatmul.mubr.bf16.gmra.mrb[0].mxu0 %v76
  %v116 = vpop.f32.mrb[0].mxu0
  %v117 = vadd.f32 %v67, %v116
  %v118 = vpop.f32.mrb[0].mxu0
  %v119 = vpop.f32.mrb[0].mxu0
  %v120 = vadd.f32 %v67, %v119
  %v121 = vpop.f32.mrb[0].mxu0
  %122 = vdwg.mxu0
  %v123 = vld [vmem:[%s4] sm:$0x1]
  %v124 = vld [vmem:[%s5] sm:$0x1]
  %vm125 = vcmask 261120
  %v126 = vsel %vm125, %v117, 0.0
  %127 = vadd.xlane.f32.xlu0 %v126
  %v128 = vpop.xlane.xlu0 %127
  %v129 = vsel %vm125, %v120, 0.0
  %130 = vadd.xlane.f32.xlu0 %v129
  %v131 = vpop.xlane.xlu0 %130
  %v132 = vrcp.pop 32.0
  %v133 = vmul.f32 %v128, %v132
  %v134 = vmul.f32 %v131, %v132
  %v135 = vmul.f32 %v117, %v117
  %v136 = vmul.f32 %v120, %v120
  %v137 = vsel %vm125, %v135, 0.0
  %138 = vadd.xlane.f32.xlu0 %v137
  %v139 = vpop.xlane.xlu0 %138
  %v140 = vsel %vm125, %v136, 0.0
  %141 = vadd.xlane.f32.xlu0 %v140
  %v142 = vpop.xlane.xlu0 %141
  %v143 = vmul.f32 %v139, %v132
  %v144 = vmul.f32 %v142, %v132
  %v145 = vmul.f32 %v133, %v133
  %v146 = vmul.f32 %v134, %v134
  %v147 = vsub.f32 %v143, %v145
  %v148 = vsub.f32 %v144, %v146
  %v149 = vsub.f32 %v117, %v133
  %v150 = vsub.f32 %v120, %v134
  %v151 = vadd.f32 %v147, 1e-05
  %v152 = vadd.f32 %v148, 1e-05
  %v153 = vrsqrt.pop %v151
  %v154 = vrsqrt.pop %v152
  %v155 = vmul.f32 %v149, %v153
  %v156 = vmul.f32 %v150, %v154
  %v158 = vlaneseq
  %v159 = vshrl.u32 %v158, 7
  %v160 = vsub.s32 0, %v159
  %v161 = vrot.slane %v123, %v160
  %v163 = vmul.f32 %v155, %v161
  %v164 = vmul.f32 %v156, %v161
  %v166 = vlaneseq
  %v167 = vshrl.u32 %v166, 7
  %v168 = vsub.s32 0, %v167
  %v169 = vrot.slane %v124, %v168
  %v171 = vadd.f32 %v163, %v169
  %v172 = vadd.f32 %v164, %v169
  %v173 = vxor.u32 %v171, 2147483648
  %v174 = vxor.u32 %v172, 2147483648
  %v175 = vmul.f32 %v173, 1.442695
  %v176 = vpow.pop %v175
  %v177 = vmul.f32 %v174, 1.442695
  %v178 = vpow.pop %v177
  %v179 = vadd.f32 %v176, 1.0
  %v180 = vadd.f32 %v178, 1.0
  %v181 = vrcp.pop %v179
  %v182 = vmul.f32 1.0, %v181
  %v183 = vrcp.pop %v180
  %v184 = vmul.f32 1.0, %v183
  %v185 = vmul.f32 %v171, %v182
  %v186 = vmul.f32 %v172, %v184
  %v187 = vpack.c.bf16 %v186, %v185
  %v188 = vld [vmem:[%s6] sm:$0xf]
  %v189 = vld [vmem:[%s6 + $0x4] sm:$0xf]
  %v190 = vld [vmem:[%s6 + $0x8] sm:$0xf]
  %v191 = vld [vmem:[%s6 + $0xc] sm:$0xf]
  %v192 = vld [vmem:[%s7] sm:$0xf]
  %v193 = vld [vmem:[%s7 + $0x4] sm:$0xf]
  %v194 = vld [vmem:[%s7 + $0x8] sm:$0xf]
  %v195 = vld [vmem:[%s7 + $0xc] sm:$0xf]
  %v198 = vunpack.c.l.b16 %v57
  %v199 = vunpack.c.l.b16 %v58
  %v200 = vpack.c.b16 %v199, %v198
  %v205 = vunpack.c.l.b16 %v192
  %v206 = vunpack.c.l.b16 %v193
  %v207 = vunpack.c.l.b16 %v194
  %v208 = vunpack.c.l.b16 %v195
  %v209 = vpack.c.b16 %v206, %v205
  %v210 = vpack.c.b16 %v208, %v207
  %v214 = vsel %vm125, %v200, 0
  %216 = vmatprep.subr.bf16.mxu0 0
  %217 = vmatpush1.bf16.msra.mxu0 %v209
  %218 = vmatprep.subr.bf16.mxu0 0
  %219 = vmatpush1.bf16.msra.mxu0 %v210
  %220 = vmatprep.subr.bf16.mxu0 0
  %221 = vmatpush1.bf16.msra.mxu0 0
  %222 = vmatprep.subr.bf16.mxu0 0
  %223 = vmatpush1.bf16.msra.mxu0 0
  %224 = vmatprep.subr.bf16.mxu0 0
  %225 = vmatpush1.bf16.msra.mxu0 0
  %226 = vmatprep.subr.bf16.mxu0 0
  %227 = vmatpush1.bf16.msra.mxu0 0
  %228 = vmatprep.subr.bf16.mxu0 0
  %229 = vmatpush1.bf16.msra.mxu0 0
  %230 = vmatprep.subr.bf16.mxu0 0
  %231 = vmatpush1.bf16.msra.mxu0 0
  %232 = vmatprep.subr.bf16.mxu0 0
  %233 = vmatpush1.bf16.msra.mxu0 0
  %234 = vmatprep.subr.bf16.mxu0 0
  %235 = vmatpush1.bf16.msra.mxu0 0
  %236 = vmatprep.subr.bf16.mxu0 0
  %237 = vmatpush1.bf16.msra.mxu0 0
  %238 = vmatprep.subr.bf16.mxu0 0
  %239 = vmatpush1.bf16.msra.mxu0 0
  %240 = vmatprep.subr.bf16.mxu0 0
  %241 = vmatpush1.bf16.msra.mxu0 0
  %242 = vmatprep.subr.bf16.mxu0 0
  %243 = vmatpush1.bf16.msra.mxu0 0
  %244 = vmatprep.subr.bf16.mxu0 0
  %245 = vmatpush1.bf16.msra.mxu0 0
  %246 = vmatprep.subr.bf16.mxu0 0
  %247 = vmatpush1.bf16.msra.mxu0 0
  %248 = vmatprep.mubr.bf16.mxu0 0
  %249 = vmatmul.mubr.bf16.gmra.mrb[0].mxu0 %v214
  %v250 = vpop.f32.mrb[0].mxu0
  %v251 = vadd.f32 0.0, %v250
  %v252 = vpop.f32.mrb[0].mxu0
  %v253 = vpop.f32.mrb[0].mxu0
  %v254 = vadd.f32 0.0, %v253
  %v255 = vpop.f32.mrb[0].mxu0
  %256 = vdwg.mxu0
  %v261 = vunpack.c.l.b16 %v188
  %v262 = vunpack.c.l.b16 %v189
  %v263 = vunpack.c.l.b16 %v190
  %v264 = vunpack.c.l.b16 %v191
  %v265 = vpack.c.b16 %v262, %v261
  %v266 = vpack.c.b16 %v264, %v263
  %v270 = vsel %vm125, %v187, 0
  %272 = vmatprep.subr.bf16.mxu0 0
  %273 = vmatpush1.bf16.msra.mxu0 %v265
  %274 = vmatprep.subr.bf16.mxu0 0
  %275 = vmatpush1.bf16.msra.mxu0 %v266
  %276 = vmatprep.subr.bf16.mxu0 0
  %277 = vmatpush1.bf16.msra.mxu0 0
  %278 = vmatprep.subr.bf16.mxu0 0
  %279 = vmatpush1.bf16.msra.mxu0 0
  %280 = vmatprep.subr.bf16.mxu0 0
  %281 = vmatpush1.bf16.msra.mxu0 0
  %282 = vmatprep.subr.bf16.mxu0 0
  %283 = vmatpush1.bf16.msra.mxu0 0
  %284 = vmatprep.subr.bf16.mxu0 0
  %285 = vmatpush1.bf16.msra.mxu0 0
  %286 = vmatprep.subr.bf16.mxu0 0
  %287 = vmatpush1.bf16.msra.mxu0 0
  %288 = vmatprep.subr.bf16.mxu0 0
  %289 = vmatpush1.bf16.msra.mxu0 0
  %290 = vmatprep.subr.bf16.mxu0 0
  %291 = vmatpush1.bf16.msra.mxu0 0
  %292 = vmatprep.subr.bf16.mxu0 0
  %293 = vmatpush1.bf16.msra.mxu0 0
  %294 = vmatprep.subr.bf16.mxu0 0
  %295 = vmatpush1.bf16.msra.mxu0 0
  %296 = vmatprep.subr.bf16.mxu0 0
  %297 = vmatpush1.bf16.msra.mxu0 0
  %298 = vmatprep.subr.bf16.mxu0 0
  %299 = vmatpush1.bf16.msra.mxu0 0
  %300 = vmatprep.subr.bf16.mxu0 0
  %301 = vmatpush1.bf16.msra.mxu0 0
  %302 = vmatprep.subr.bf16.mxu0 0
  %303 = vmatpush1.bf16.msra.mxu0 0
  %304 = vmatprep.mubr.bf16.mxu0 0
  %305 = vmatmul.mubr.bf16.gmra.mrb[0].mxu0 %v270
  %v306 = vpop.f32.mrb[0].mxu0
  %v307 = vadd.f32 %v251, %v306
  %v308 = vpop.f32.mrb[0].mxu0
  %v309 = vpop.f32.mrb[0].mxu0
  %v310 = vadd.f32 %v254, %v309
  %v311 = vpop.f32.mrb[0].mxu0
  %312 = vdwg.mxu0
  %v313 = vld [vmem:[%s8] sm:$0x1]
  %v315 = vlaneseq
  %v316 = vshrl.u32 %v315, 7
  %v317 = vsub.s32 0, %v316
  %v318 = vrot.slane %v313, %v317
  %v320 = vadd.f32 %v307, %v318
  %v321 = vadd.f32 %v310, %v318
  %v322 = vld [vmem:[%s9] sm:$0x1]
  %v323 = vld [vmem:[%s10] sm:$0x1]
  %vm324 = vcmask 523264
  %v325 = vsel %vm324, %v320, 0.0
  %326 = vadd.xlane.f32.xlu0 %v325
  %v327 = vpop.xlane.xlu0 %326
  %v328 = vsel %vm324, %v321, 0.0
  %329 = vadd.xlane.f32.xlu0 %v328
  %v330 = vpop.xlane.xlu0 %329
  %v331 = vrcp.pop 64.0
  %v332 = vmul.f32 %v327, %v331
  %v333 = vmul.f32 %v330, %v331
  %v334 = vmul.f32 %v320, %v320
  %v335 = vmul.f32 %v321, %v321
  %v336 = vsel %vm324, %v334, 0.0
  %337 = vadd.xlane.f32.xlu0 %v336
  %v338 = vpop.xlane.xlu0 %337
  %v339 = vsel %vm324, %v335, 0.0
  %340 = vadd.xlane.f32.xlu0 %v339
  %v341 = vpop.xlane.xlu0 %340
  %v342 = vmul.f32 %v338, %v331
  %v343 = vmul.f32 %v341, %v331
  %v344 = vmul.f32 %v332, %v332
  %v345 = vmul.f32 %v333, %v333
  %v346 = vsub.f32 %v342, %v344
  %v347 = vsub.f32 %v343, %v345
  %v348 = vsub.f32 %v320, %v332
  %v349 = vsub.f32 %v321, %v333
  %v350 = vadd.f32 %v346, 1e-05
  %v351 = vadd.f32 %v347, 1e-05
  %v352 = vrsqrt.pop %v350
  %v353 = vrsqrt.pop %v351
  %v354 = vmul.f32 %v348, %v352
  %v355 = vmul.f32 %v349, %v353
  %v357 = vlaneseq
  %v358 = vshrl.u32 %v357, 7
  %v359 = vsub.s32 0, %v358
  %v360 = vrot.slane %v322, %v359
  %v362 = vmul.f32 %v354, %v360
  %v363 = vmul.f32 %v355, %v360
  %v365 = vlaneseq
  %v366 = vshrl.u32 %v365, 7
  %v367 = vsub.s32 0, %v366
  %v368 = vrot.slane %v323, %v367
  %v370 = vadd.f32 %v362, %v368
  %v371 = vadd.f32 %v363, %v368
  %v372 = vxor.u32 %v370, 2147483648
  %v373 = vxor.u32 %v371, 2147483648
  %v374 = vmul.f32 %v372, 1.442695
  %v375 = vpow.pop %v374
  %v376 = vmul.f32 %v373, 1.442695
  %v377 = vpow.pop %v376
  %v378 = vadd.f32 %v375, 1.0
  %v379 = vadd.f32 %v377, 1.0
  %v380 = vrcp.pop %v378
  %v381 = vmul.f32 1.0, %v380
  %v382 = vrcp.pop %v379
  %v383 = vmul.f32 1.0, %v382
  %v384 = vmul.f32 %v370, %v381
  %v385 = vmul.f32 %v371, %v383
  %v386 = vpack.c.bf16 %v385, %v384
  %v387 = vld [vmem:[%s11] sm:$0xf]
  %v388 = vld [vmem:[%s11 + $0x4] sm:$0xf]
  %v389 = vld [vmem:[%s11 + $0x8] sm:$0xf]
  %v390 = vld [vmem:[%s11 + $0xc] sm:$0xf]
  %v391 = vld [vmem:[%s11 + $0x10] sm:$0xf]
  %v392 = vld [vmem:[%s11 + $0x14] sm:$0xf]
  %v393 = vld [vmem:[%s11 + $0x18] sm:$0xf]
  %v394 = vld [vmem:[%s11 + $0x1c] sm:$0xf]
  %v395 = vld [vmem:[%s12] sm:$0x1]
  %v397 = vlaneseq
  %v398 = vshrl.u32 %v397, 7
  %v399 = vsub.s32 0, %v398
  %v400 = vrot.slane %v395, %v399
  %v410 = vunpack.c.l.b16 %v387
  %v411 = vunpack.c.l.b16 %v388
  %v412 = vunpack.c.l.b16 %v389
  %v413 = vunpack.c.l.b16 %v390
  %v414 = vunpack.c.l.b16 %v391
  %v415 = vunpack.c.l.b16 %v392
  %v416 = vunpack.c.l.b16 %v393
  %v417 = vunpack.c.l.b16 %v394
  %v418 = vpack.c.b16 %v411, %v410
  %v419 = vpack.c.b16 %v413, %v412
  %v420 = vpack.c.b16 %v415, %v414
  %v421 = vpack.c.b16 %v417, %v416
  %v427 = vsel %vm324, %v386, 0
  %429 = vmatprep.subr.bf16.mxu0 0
  %430 = vmatpush1.bf16.msra.mxu0 %v418
  %431 = vmatprep.subr.bf16.mxu0 0
  %432 = vmatpush1.bf16.msra.mxu0 %v419
  %433 = vmatprep.subr.bf16.mxu0 0
  %434 = vmatpush1.bf16.msra.mxu0 %v420
  %435 = vmatprep.subr.bf16.mxu0 0
  %436 = vmatpush1.bf16.msra.mxu0 %v421
  %437 = vmatprep.subr.bf16.mxu0 0
  %438 = vmatpush1.bf16.msra.mxu0 0
  %439 = vmatprep.subr.bf16.mxu0 0
  %440 = vmatpush1.bf16.msra.mxu0 0
  %441 = vmatprep.subr.bf16.mxu0 0
  %442 = vmatpush1.bf16.msra.mxu0 0
  %443 = vmatprep.subr.bf16.mxu0 0
  %444 = vmatpush1.bf16.msra.mxu0 0
  %445 = vmatprep.subr.bf16.mxu0 0
  %446 = vmatpush1.bf16.msra.mxu0 0
  %447 = vmatprep.subr.bf16.mxu0 0
  %448 = vmatpush1.bf16.msra.mxu0 0
  %449 = vmatprep.subr.bf16.mxu0 0
  %450 = vmatpush1.bf16.msra.mxu0 0
  %451 = vmatprep.subr.bf16.mxu0 0
  %452 = vmatpush1.bf16.msra.mxu0 0
  %453 = vmatprep.subr.bf16.mxu0 0
  %454 = vmatpush1.bf16.msra.mxu0 0
  %455 = vmatprep.subr.bf16.mxu0 0
  %456 = vmatpush1.bf16.msra.mxu0 0
  %457 = vmatprep.subr.bf16.mxu0 0
  %458 = vmatpush1.bf16.msra.mxu0 0
  %459 = vmatprep.subr.bf16.mxu0 0
  %460 = vmatpush1.bf16.msra.mxu0 0
  %461 = vmatprep.mubr.bf16.mxu0 0
  %462 = vmatmul.mubr.bf16.gmra.mrb[0].mxu0 %v427
  %v463 = vpop.f32.mrb[0].mxu0
  %v464 = vadd.f32 %v400, %v463
  %v465 = vpop.f32.mrb[0].mxu0
  %v466 = vpop.f32.mrb[0].mxu0
  %v467 = vadd.f32 %v400, %v466
  %v468 = vpop.f32.mrb[0].mxu0
  %469 = vdwg.mxu0
  %v470 = vadd.f32 %v117, %v464
  %v471 = vadd.f32 %v120, %v467
  %s472 = scalar_lea.vmem %s4, 1
  %v473 = vld [vmem:[%s472] sm:$0x1]
  %s474 = scalar_lea.vmem %s5, 1
  %v475 = vld [vmem:[%s474] sm:$0x1]
  %v476 = vsel %vm125, %v470, 0.0
  %477 = vadd.xlane.f32.xlu0 %v476
  %v478 = vpop.xlane.xlu0 %477
  %v479 = vsel %vm125, %v471, 0.0
  %480 = vadd.xlane.f32.xlu0 %v479
  %v481 = vpop.xlane.xlu0 %480
  %v482 = vmul.f32 %v478, %v132
  %v483 = vmul.f32 %v481, %v132
  %v484 = vmul.f32 %v470, %v470
  %v485 = vmul.f32 %v471, %v471
  %v486 = vsel %vm125, %v484, 0.0
  %487 = vadd.xlane.f32.xlu0 %v486
  %v488 = vpop.xlane.xlu0 %487
  %v489 = vsel %vm125, %v485, 0.0
  %490 = vadd.xlane.f32.xlu0 %v489
  %v491 = vpop.xlane.xlu0 %490
  %v492 = vmul.f32 %v488, %v132
  %v493 = vmul.f32 %v491, %v132
  %v494 = vmul.f32 %v482, %v482
  %v495 = vmul.f32 %v483, %v483
  %v496 = vsub.f32 %v492, %v494
  %v497 = vsub.f32 %v493, %v495
  %v498 = vsub.f32 %v470, %v482
  %v499 = vsub.f32 %v471, %v483
  %v500 = vadd.f32 %v496, 1e-05
  %v501 = vadd.f32 %v497, 1e-05
  %v502 = vrsqrt.pop %v500
  %v503 = vrsqrt.pop %v501
  %v504 = vmul.f32 %v498, %v502
  %v505 = vmul.f32 %v499, %v503
  %v507 = vlaneseq
  %v508 = vshrl.u32 %v507, 7
  %v509 = vsub.s32 0, %v508
  %v510 = vrot.slane %v473, %v509
  %v512 = vmul.f32 %v504, %v510
  %v513 = vmul.f32 %v505, %v510
  %v515 = vlaneseq
  %v516 = vshrl.u32 %v515, 7
  %v517 = vsub.s32 0, %v516
  %v518 = vrot.slane %v475, %v517
  %v520 = vadd.f32 %v512, %v518
  %v521 = vadd.f32 %v513, %v518
  %v522 = vxor.u32 %v520, 2147483648
  %v523 = vxor.u32 %v521, 2147483648
  %v524 = vmul.f32 %v522, 1.442695
  %v525 = vpow.pop %v524
  %v526 = vmul.f32 %v523, 1.442695
  %v527 = vpow.pop %v526
  %v528 = vadd.f32 %v525, 1.0
  %v529 = vadd.f32 %v527, 1.0
  %v530 = vrcp.pop %v528
  %v531 = vmul.f32 1.0, %v530
  %v532 = vrcp.pop %v529
  %v533 = vmul.f32 1.0, %v532
  %v534 = vmul.f32 %v520, %v531
  %v535 = vmul.f32 %v521, %v533
  %v536 = vpack.c.bf16 %v535, %v534
  %s537 = scalar_lea.vmem %s6, 16
  %v538 = vld [vmem:[%s537] sm:$0xf]
  %v539 = vld [vmem:[%s537 + $0x4] sm:$0xf]
  %v540 = vld [vmem:[%s537 + $0x8] sm:$0xf]
  %v541 = vld [vmem:[%s537 + $0xc] sm:$0xf]
  %s542 = scalar_lea.vmem %s7, 16
  %v543 = vld [vmem:[%s542] sm:$0xf]
  %v544 = vld [vmem:[%s542 + $0x4] sm:$0xf]
  %v545 = vld [vmem:[%s542 + $0x8] sm:$0xf]
  %v546 = vld [vmem:[%s542 + $0xc] sm:$0xf]
  %v551 = vunpack.c.l.b16 %v543
  %v552 = vunpack.c.l.b16 %v544
  %v553 = vunpack.c.l.b16 %v545
  %v554 = vunpack.c.l.b16 %v546
  %v555 = vpack.c.b16 %v552, %v551
  %v556 = vpack.c.b16 %v554, %v553
  %559 = vmatprep.subr.bf16.mxu0 0
  %560 = vmatpush1.bf16.msra.mxu0 %v555
  %561 = vmatprep.subr.bf16.mxu0 0
  %562 = vmatpush1.bf16.msra.mxu0 %v556
  %563 = vmatprep.subr.bf16.mxu0 0
  %564 = vmatpush1.bf16.msra.mxu0 0
  %565 = vmatprep.subr.bf16.mxu0 0
  %566 = vmatpush1.bf16.msra.mxu0 0
  %567 = vmatprep.subr.bf16.mxu0 0
  %568 = vmatpush1.bf16.msra.mxu0 0
  %569 = vmatprep.subr.bf16.mxu0 0
  %570 = vmatpush1.bf16.msra.mxu0 0
  %571 = vmatprep.subr.bf16.mxu0 0
  %572 = vmatpush1.bf16.msra.mxu0 0
  %573 = vmatprep.subr.bf16.mxu0 0
  %574 = vmatpush1.bf16.msra.mxu0 0
  %575 = vmatprep.subr.bf16.mxu0 0
  %576 = vmatpush1.bf16.msra.mxu0 0
  %577 = vmatprep.subr.bf16.mxu0 0
  %578 = vmatpush1.bf16.msra.mxu0 0
  %579 = vmatprep.subr.bf16.mxu0 0
  %580 = vmatpush1.bf16.msra.mxu0 0
  %581 = vmatprep.subr.bf16.mxu0 0
  %582 = vmatpush1.bf16.msra.mxu0 0
  %583 = vmatprep.subr.bf16.mxu0 0
  %584 = vmatpush1.bf16.msra.mxu0 0
  %585 = vmatprep.subr.bf16.mxu0 0
  %586 = vmatpush1.bf16.msra.mxu0 0
  %587 = vmatprep.subr.bf16.mxu0 0
  %588 = vmatpush1.bf16.msra.mxu0 0
  %589 = vmatprep.subr.bf16.mxu0 0
  %590 = vmatpush1.bf16.msra.mxu0 0
  %591 = vmatprep.mubr.bf16.mxu0 0
  %592 = vmatmul.mubr.bf16.gmra.mrb[0].mxu0 %v214
  %v593 = vpop.f32.mrb[0].mxu0
  %v594 = vadd.f32 0.0, %v593
  %v595 = vpop.f32.mrb[0].mxu0
  %v596 = vpop.f32.mrb[0].mxu0
  %v597 = vadd.f32 0.0, %v596
  %v598 = vpop.f32.mrb[0].mxu0
  %599 = vdwg.mxu0
  %v604 = vunpack.c.l.b16 %v538
  %v605 = vunpack.c.l.b16 %v539
  %v606 = vunpack.c.l.b16 %v540
  %v607 = vunpack.c.l.b16 %v541
  %v608 = vpack.c.b16 %v605, %v604
  %v609 = vpack.c.b16 %v607, %v606
  %v613 = vsel %vm125, %v536, 0
  %615 = vmatprep.subr.bf16.mxu0 0
  %616 = vmatpush1.bf16.msra.mxu0 %v608
  %617 = vmatprep.subr.bf16.mxu0 0
  %618 = vmatpush1.bf16.msra.mxu0 %v609
  %619 = vmatprep.subr.bf16.mxu0 0
  %620 = vmatpush1.bf16.msra.mxu0 0
  %621 = vmatprep.subr.bf16.mxu0 0
  %622 = vmatpush1.bf16.msra.mxu0 0
  %623 = vmatprep.subr.bf16.mxu0 0
  %624 = vmatpush1.bf16.msra.mxu0 0
  %625 = vmatprep.subr.bf16.mxu0 0
  %626 = vmatpush1.bf16.msra.mxu0 0
  %627 = vmatprep.subr.bf16.mxu0 0
  %628 = vmatpush1.bf16.msra.mxu0 0
  %629 = vmatprep.subr.bf16.mxu0 0
  %630 = vmatpush1.bf16.msra.mxu0 0
  %631 = vmatprep.subr.bf16.mxu0 0
  %632 = vmatpush1.bf16.msra.mxu0 0
  %633 = vmatprep.subr.bf16.mxu0 0
  %634 = vmatpush1.bf16.msra.mxu0 0
  %635 = vmatprep.subr.bf16.mxu0 0
  %636 = vmatpush1.bf16.msra.mxu0 0
  %637 = vmatprep.subr.bf16.mxu0 0
  %638 = vmatpush1.bf16.msra.mxu0 0
  %639 = vmatprep.subr.bf16.mxu0 0
  %640 = vmatpush1.bf16.msra.mxu0 0
  %641 = vmatprep.subr.bf16.mxu0 0
  %642 = vmatpush1.bf16.msra.mxu0 0
  %643 = vmatprep.subr.bf16.mxu0 0
  %644 = vmatpush1.bf16.msra.mxu0 0
  %645 = vmatprep.subr.bf16.mxu0 0
  %646 = vmatpush1.bf16.msra.mxu0 0
  %647 = vmatprep.mubr.bf16.mxu0 0
  %648 = vmatmul.mubr.bf16.gmra.mrb[0].mxu0 %v613
  %v649 = vpop.f32.mrb[0].mxu0
  %v650 = vadd.f32 %v594, %v649
  %v651 = vpop.f32.mrb[0].mxu0
  %v652 = vpop.f32.mrb[0].mxu0
  %v653 = vadd.f32 %v597, %v652
  %v654 = vpop.f32.mrb[0].mxu0
  %655 = vdwg.mxu0
  %s656 = scalar_lea.vmem %s8, 1
  %v657 = vld [vmem:[%s656] sm:$0x1]
  %v659 = vlaneseq
  %v660 = vshrl.u32 %v659, 7
  %v661 = vsub.s32 0, %v660
  %v662 = vrot.slane %v657, %v661
  %v664 = vadd.f32 %v650, %v662
  %v665 = vadd.f32 %v653, %v662
  %s666 = scalar_lea.vmem %s9, 1
  %v667 = vld [vmem:[%s666] sm:$0x1]
  %s668 = scalar_lea.vmem %s10, 1
  %v669 = vld [vmem:[%s668] sm:$0x1]
  %v670 = vsel %vm324, %v664, 0.0
  %671 = vadd.xlane.f32.xlu0 %v670
  %v672 = vpop.xlane.xlu0 %671
  %v673 = vsel %vm324, %v665, 0.0
  %674 = vadd.xlane.f32.xlu0 %v673
  %v675 = vpop.xlane.xlu0 %674
  %v676 = vmul.f32 %v672, %v331
  %v677 = vmul.f32 %v675, %v331
  %v678 = vmul.f32 %v664, %v664
  %v679 = vmul.f32 %v665, %v665
  %v680 = vsel %vm324, %v678, 0.0
  %681 = vadd.xlane.f32.xlu0 %v680
  %v682 = vpop.xlane.xlu0 %681
  %v683 = vsel %vm324, %v679, 0.0
  %684 = vadd.xlane.f32.xlu0 %v683
  %v685 = vpop.xlane.xlu0 %684
  %v686 = vmul.f32 %v682, %v331
  %v687 = vmul.f32 %v685, %v331
  %v688 = vmul.f32 %v676, %v676
  %v689 = vmul.f32 %v677, %v677
  %v690 = vsub.f32 %v686, %v688
  %v691 = vsub.f32 %v687, %v689
  %v692 = vsub.f32 %v664, %v676
  %v693 = vsub.f32 %v665, %v677
  %v694 = vadd.f32 %v690, 1e-05
  %v695 = vadd.f32 %v691, 1e-05
  %v696 = vrsqrt.pop %v694
  %v697 = vrsqrt.pop %v695
  %v698 = vmul.f32 %v692, %v696
  %v699 = vmul.f32 %v693, %v697
  %v701 = vlaneseq
  %v702 = vshrl.u32 %v701, 7
  %v703 = vsub.s32 0, %v702
  %v704 = vrot.slane %v667, %v703
  %v706 = vmul.f32 %v698, %v704
  %v707 = vmul.f32 %v699, %v704
  %v709 = vlaneseq
  %v710 = vshrl.u32 %v709, 7
  %v711 = vsub.s32 0, %v710
  %v712 = vrot.slane %v669, %v711
  %v714 = vadd.f32 %v706, %v712
  %v715 = vadd.f32 %v707, %v712
  %v716 = vxor.u32 %v714, 2147483648
  %v717 = vxor.u32 %v715, 2147483648
  %v718 = vmul.f32 %v716, 1.442695
  %v719 = vpow.pop %v718
  %v720 = vmul.f32 %v717, 1.442695
  %v721 = vpow.pop %v720
  %v722 = vadd.f32 %v719, 1.0
  %v723 = vadd.f32 %v721, 1.0
  %v724 = vrcp.pop %v722
  %v725 = vmul.f32 1.0, %v724
  %v726 = vrcp.pop %v723
  %v727 = vmul.f32 1.0, %v726
  %v728 = vmul.f32 %v714, %v725
  %v729 = vmul.f32 %v715, %v727
  %v730 = vpack.c.bf16 %v729, %v728
  %s731 = scalar_lea.vmem %s11, 32
  %v732 = vld [vmem:[%s731] sm:$0xf]
  %v733 = vld [vmem:[%s731 + $0x4] sm:$0xf]
  %v734 = vld [vmem:[%s731 + $0x8] sm:$0xf]
  %v735 = vld [vmem:[%s731 + $0xc] sm:$0xf]
  %v736 = vld [vmem:[%s731 + $0x10] sm:$0xf]
  %v737 = vld [vmem:[%s731 + $0x14] sm:$0xf]
  %v738 = vld [vmem:[%s731 + $0x18] sm:$0xf]
  %v739 = vld [vmem:[%s731 + $0x1c] sm:$0xf]
  %s740 = scalar_lea.vmem %s12, 1
  %v741 = vld [vmem:[%s740] sm:$0x1]
  %v743 = vlaneseq
  %v744 = vshrl.u32 %v743, 7
  %v745 = vsub.s32 0, %v744
  %v746 = vrot.slane %v741, %v745
  %v756 = vunpack.c.l.b16 %v732
  %v757 = vunpack.c.l.b16 %v733
  %v758 = vunpack.c.l.b16 %v734
  %v759 = vunpack.c.l.b16 %v735
  %v760 = vunpack.c.l.b16 %v736
  %v761 = vunpack.c.l.b16 %v737
  %v762 = vunpack.c.l.b16 %v738
  %v763 = vunpack.c.l.b16 %v739
  %v764 = vpack.c.b16 %v757, %v756
  %v765 = vpack.c.b16 %v759, %v758
  %v766 = vpack.c.b16 %v761, %v760
  %v767 = vpack.c.b16 %v763, %v762
  %v773 = vsel %vm324, %v730, 0
  %775 = vmatprep.subr.bf16.mxu0 0
  %776 = vmatpush1.bf16.msra.mxu0 %v764
  %777 = vmatprep.subr.bf16.mxu0 0
  %778 = vmatpush1.bf16.msra.mxu0 %v765
  %779 = vmatprep.subr.bf16.mxu0 0
  %780 = vmatpush1.bf16.msra.mxu0 %v766
  %781 = vmatprep.subr.bf16.mxu0 0
  %782 = vmatpush1.bf16.msra.mxu0 %v767
  %783 = vmatprep.subr.bf16.mxu0 0
  %784 = vmatpush1.bf16.msra.mxu0 0
  %785 = vmatprep.subr.bf16.mxu0 0
  %786 = vmatpush1.bf16.msra.mxu0 0
  %787 = vmatprep.subr.bf16.mxu0 0
  %788 = vmatpush1.bf16.msra.mxu0 0
  %789 = vmatprep.subr.bf16.mxu0 0
  %790 = vmatpush1.bf16.msra.mxu0 0
  %791 = vmatprep.subr.bf16.mxu0 0
  %792 = vmatpush1.bf16.msra.mxu0 0
  %793 = vmatprep.subr.bf16.mxu0 0
  %794 = vmatpush1.bf16.msra.mxu0 0
  %795 = vmatprep.subr.bf16.mxu0 0
  %796 = vmatpush1.bf16.msra.mxu0 0
  %797 = vmatprep.subr.bf16.mxu0 0
  %798 = vmatpush1.bf16.msra.mxu0 0
  %799 = vmatprep.subr.bf16.mxu0 0
  %800 = vmatpush1.bf16.msra.mxu0 0
  %801 = vmatprep.subr.bf16.mxu0 0
  %802 = vmatpush1.bf16.msra.mxu0 0
  %803 = vmatprep.subr.bf16.mxu0 0
  %804 = vmatpush1.bf16.msra.mxu0 0
  %805 = vmatprep.subr.bf16.mxu0 0
  %806 = vmatpush1.bf16.msra.mxu0 0
  %807 = vmatprep.mubr.bf16.mxu0 0
  %808 = vmatmul.mubr.bf16.gmra.mrb[0].mxu0 %v773
  %v809 = vpop.f32.mrb[0].mxu0
  %v810 = vadd.f32 %v746, %v809
  %v811 = vpop.f32.mrb[0].mxu0
  %v812 = vpop.f32.mrb[0].mxu0
  %v813 = vadd.f32 %v746, %v812
  %v814 = vpop.f32.mrb[0].mxu0
  %815 = vdwg.mxu0
  %v816 = vadd.f32 %v470, %v810
  %v817 = vadd.f32 %v471, %v813
  %v818 = vld [vmem:[%s13] sm:$0x1]
  %v819 = vld [vmem:[%s14] sm:$0x1]
  %v820 = vsel %vm125, %v816, 0.0
  %821 = vadd.xlane.f32.xlu0 %v820
  %v822 = vpop.xlane.xlu0 %821
  %v823 = vsel %vm125, %v817, 0.0
  %824 = vadd.xlane.f32.xlu0 %v823
  %v825 = vpop.xlane.xlu0 %824
  %v826 = vmul.f32 %v822, %v132
  %v827 = vmul.f32 %v825, %v132
  %v828 = vmul.f32 %v816, %v816
  %v829 = vmul.f32 %v817, %v817
  %v830 = vsel %vm125, %v828, 0.0
  %831 = vadd.xlane.f32.xlu0 %v830
  %v832 = vpop.xlane.xlu0 %831
  %v833 = vsel %vm125, %v829, 0.0
  %834 = vadd.xlane.f32.xlu0 %v833
  %v835 = vpop.xlane.xlu0 %834
  %v836 = vmul.f32 %v832, %v132
  %v837 = vmul.f32 %v835, %v132
  %v838 = vmul.f32 %v826, %v826
  %v839 = vmul.f32 %v827, %v827
  %v840 = vsub.f32 %v836, %v838
  %v841 = vsub.f32 %v837, %v839
  %v842 = vsub.f32 %v816, %v826
  %v843 = vsub.f32 %v817, %v827
  %v844 = vadd.f32 %v840, 1e-06
  %v845 = vadd.f32 %v841, 1e-06
  %v846 = vrsqrt.pop %v844
  %v847 = vrsqrt.pop %v845
  %v848 = vmul.f32 %v842, %v846
  %v849 = vmul.f32 %v843, %v847
  %v851 = vlaneseq
  %v852 = vshrl.u32 %v851, 7
  %v853 = vsub.s32 0, %v852
  %v854 = vrot.slane %v818, %v853
  %v856 = vmul.f32 %v848, %v854
  %v857 = vmul.f32 %v849, %v854
  %v859 = vlaneseq
  %v860 = vshrl.u32 %v859, 7
  %v861 = vsub.s32 0, %v860
  %v862 = vrot.slane %v819, %v861
  %v864 = vadd.f32 %v856, %v862
  %v865 = vadd.f32 %v857, %v862
  %v866 = vxor.u32 %v864, 2147483648
  %v867 = vxor.u32 %v865, 2147483648
  %v868 = vmul.f32 %v866, 1.442695
  %v869 = vpow.pop %v868
  %v870 = vmul.f32 %v867, 1.442695
  %v871 = vpow.pop %v870
  %v872 = vadd.f32 %v869, 1.0
  %v873 = vadd.f32 %v871, 1.0
  %v874 = vrcp.pop %v872
  %v875 = vmul.f32 1.0, %v874
  %v876 = vrcp.pop %v873
  %v877 = vmul.f32 1.0, %v876
  %v878 = vmul.f32 %v864, %v875
  %v879 = vmul.f32 %v865, %v877
  %v880 = vpack.c.bf16 %v879, %v878
  %v881 = vld [vmem:[%s15] sm:$0xf]
  %v882 = vld [vmem:[%s15 + $0x4] sm:$0xf]
  %v883 = vld [vmem:[%s15 + $0x8] sm:$0xf]
  %v884 = vld [vmem:[%s15 + $0xc] sm:$0xf]
  %v885 = vld [vmem:[%s16] sm:$0x1]
  %v887 = vlaneseq
  %v888 = vshrl.u32 %v887, 7
  %v889 = vsub.s32 0, %v888
  %v890 = vrot.slane %v885, %v889
  %v896 = vunpack.c.l.b16 %v881
  %v897 = vunpack.c.l.b16 %v882
  %v898 = vunpack.c.l.b16 %v883
  %v899 = vunpack.c.l.b16 %v884
  %v900 = vpack.c.b16 %v897, %v896
  %v901 = vpack.c.b16 %v899, %v898
  %v905 = vsel %vm125, %v880, 0
  %907 = vmatprep.subr.bf16.mxu0 0
  %908 = vmatpush1.bf16.msra.mxu0 %v900
  %909 = vmatprep.subr.bf16.mxu0 0
  %910 = vmatpush1.bf16.msra.mxu0 %v901
  %911 = vmatprep.subr.bf16.mxu0 0
  %912 = vmatpush1.bf16.msra.mxu0 0
  %913 = vmatprep.subr.bf16.mxu0 0
  %914 = vmatpush1.bf16.msra.mxu0 0
  %915 = vmatprep.subr.bf16.mxu0 0
  %916 = vmatpush1.bf16.msra.mxu0 0
  %917 = vmatprep.subr.bf16.mxu0 0
  %918 = vmatpush1.bf16.msra.mxu0 0
  %919 = vmatprep.subr.bf16.mxu0 0
  %920 = vmatpush1.bf16.msra.mxu0 0
  %921 = vmatprep.subr.bf16.mxu0 0
  %922 = vmatpush1.bf16.msra.mxu0 0
  %923 = vmatprep.subr.bf16.mxu0 0
  %924 = vmatpush1.bf16.msra.mxu0 0
  %925 = vmatprep.subr.bf16.mxu0 0
  %926 = vmatpush1.bf16.msra.mxu0 0
  %927 = vmatprep.subr.bf16.mxu0 0
  %928 = vmatpush1.bf16.msra.mxu0 0
  %929 = vmatprep.subr.bf16.mxu0 0
  %930 = vmatpush1.bf16.msra.mxu0 0
  %931 = vmatprep.subr.bf16.mxu0 0
  %932 = vmatpush1.bf16.msra.mxu0 0
  %933 = vmatprep.subr.bf16.mxu0 0
  %934 = vmatpush1.bf16.msra.mxu0 0
  %935 = vmatprep.subr.bf16.mxu0 0
  %936 = vmatpush1.bf16.msra.mxu0 0
  %937 = vmatprep.subr.bf16.mxu0 0
  %938 = vmatpush1.bf16.msra.mxu0 0
  %939 = vmatprep.mubr.bf16.mxu0 0
  %940 = vmatmul.mubr.bf16.gmra.mrb[0].mxu0 %v905
  %v941 = vpop.f32.mrb[0].mxu0
  %v942 = vadd.f32 %v890, %v941
  %v943 = vpop.f32.mrb[0].mxu0
  %v944 = vpop.f32.mrb[0].mxu0
  %v945 = vadd.f32 %v890, %v944
  %v946 = vpop.f32.mrb[0].mxu0
  %947 = vdwg.mxu0
  %948 = vst.msk [vmem:[%s17] sm:$0xff] %vm74, %v942
  %949 = vst.msk [vmem:[%s17 + $0x8] sm:$0xff] %vm74, %v945
  // Predicated region
  $region70: #{tpu_custom_call.1} parent=0 // pred_check
    _
  $region71: #{tpu_custom_call.1} parent=0 // pred_check_branch
    %951 = sbr.rel (0) target = $region73
  $region72: #{tpu_custom_call.1} parent=0 // pred_region
    _
  $region73: #{tpu_custom_call.1} parent=0 // pred_fallthru
    _
  // Predicated region
  $region74: #{tpu_custom_call.1} parent=0 // pred_check
    _
  $region75: #{tpu_custom_call.1} parent=0 // pred_check_branch
    %953 = sbr.rel (0) target = $region77
  $region76: #{tpu_custom_call.1} parent=0 // pred_region
    _
  $region77: #{tpu_custom_call.1} parent=0 // pred_fallthru
    _

</llo_original>
